<compile_context>
chip_gen: v6e
topology: v6e:2x2x1
jax: 0.10.0
libtpu: 0.0.40
codegen_flags: <defaults>
</compile_context>

<pallas_src>
import math
import functools

import jax
import jax.numpy as jnp
from jax import lax
from jax.experimental import pallas as pl
from jax.experimental.pallas import tpu as pltpu


# -----------------------------------------------------------------------------
# Fused multi-head attention kernel: grid = (B, num_query_tiles)
# -----------------------------------------------------------------------------
def mha_kernel(x_ref, wq_ref, bq_ref, wkv_ref, bkv_ref, wp_ref, bp_ref,
               o_ref, kv_scr, y_scr, *, num_heads, head_size, scale, q_tile):
    # x_ref   : (1, T, C)   full sequence for this batch (compute dtype)
    # wq_ref  : (C, C)      all-head query weights        (compute dtype)
    # wkv_ref : (C, 2C)     [Wk_allheads | Wv_allheads]   (compute dtype)
    # wp_ref  : (C, C)      output projection             (compute dtype)
    # bq/bkv/bp             biases in f32
    # o_ref   : (1, tq, C)  lane-dense output tile
    # kv_scr  : (T, 2C)     resident K|V cache for the current batch (compute dtype)
    # y_scr   : (tq, C)     f32 per-head output accumulator
    C = num_heads * head_size
    tq = q_tile
    cdt = kv_scr.dtype                      # compute dtype (bf16 in production)
    qi = pl.program_id(1)

    # --- KV projection: computed once per batch, cached in VMEM scratch --------
    @pl.when(qi == 0)
    def _():
        x_all = x_ref[0]                    # (T, C)
        kv = jnp.dot(x_all, wkv_ref[...],
                     preferred_element_type=jnp.float32) + bkv_ref[...]   # (T, 2C) f32
        kv_scr[...] = kv.astype(cdt)

    # --- Q projection for this query tile (softmax scale folded in once) -------
    qs = pl.multiple_of(qi * tq, tq)
    x_q = x_ref[0, pl.ds(qs, tq), :]                                      # (tq, C)
    q = jnp.dot(x_q, wq_ref[...],
                preferred_element_type=jnp.float32) + bq_ref[...]         # (tq, C) f32
    q = (q * scale).astype(cdt)

    # Static causal mask for the diagonal KV block (kv_tile == q_tile, so only
    # the last visited block needs masking; earlier blocks are fully visible).
    row = lax.broadcasted_iota(jnp.int32, (tq, tq), 0)
    col = lax.broadcasted_iota(jnp.int32, (tq, tq), 1)
    local_causal = row >= col
    neg = jnp.float32(-1e30)                # finite mask value (NaN-safe vs. -inf)

    n_kv = qi + 1                           # causally visible KV tiles (dynamic)

    for h in range(num_heads):              # static unroll; num_heads is small
        lo = h * head_size
        q_h = q[:, lo:lo + head_size]       # (tq, Hs)

        def body(j, carry):
            m, l, acc = carry
            ko = pl.multiple_of(j * tq, tq)
            k_blk = kv_scr[pl.ds(ko, tq), lo:lo + head_size]              # (tq, Hs)
            v_blk = kv_scr[pl.ds(ko, tq), C + lo:C + lo + head_size]      # (tq, Hs)
            # q @ k^T without an explicit transpose (contract head dim of both).
            s = lax.dot_general(q_h, k_blk, (((1,), (1,)), ((), ())),
                                preferred_element_type=jnp.float32)       # (tq, tq)
            s = jnp.where(jnp.logical_or(j < qi, local_causal), s, neg)
            # online softmax (f32)
            m_new = jnp.maximum(m, jnp.max(s, axis=-1, keepdims=True))
            alpha = jnp.exp(m - m_new)
            p = jnp.exp(s - m_new)
            l_new = alpha * l + jnp.sum(p, axis=-1, keepdims=True)
            acc_new = alpha * acc + jnp.dot(p.astype(cdt), v_blk,
                                            preferred_element_type=jnp.float32)
            return m_new, l_new, acc_new

        m0 = jnp.full((tq, 1), -1e30, jnp.float32)
        l0 = jnp.zeros((tq, 1), jnp.float32)
        a0 = jnp.zeros((tq, head_size), jnp.float32)
        m, l, acc = lax.fori_loop(0, n_kv, body, (m0, l0, a0))

        # write this head's normalized output straight into the scratch slab
        y_scr[:, lo:lo + head_size] = acc * pl.reciprocal(l, approx=True)

    # fused output projection, written once, lane-dense, in (B, T, C) layout
    y = y_scr[...].astype(cdt)                                            # (tq, C)
    out = jnp.dot(y, wp_ref[...],
                  preferred_element_type=jnp.float32) + bp_ref[...]       # (tq, C) f32
    o_ref[0] = out.astype(o_ref.dtype)


# -----------------------------------------------------------------------------
# Wrapper
# -----------------------------------------------------------------------------
def multi_head_attention(x, params, num_heads, head_size, q_tile=None,
                         compute_dtype=jnp.bfloat16):
    B, T, C = x.shape
    assert C == num_heads * head_size
    # NOTE: matches the PyTorch reference, which scales by x.shape[-1] (= n_embed),
    # not by head_size, inside each AttentionHead.
    scale = C ** (-0.5)

    # Query/KV tile size: whole sequence when small, 256-row tiles when large
    # (fills the 256-wide MXU M dim on v6e/v7x; pass q_tile=128 explicitly on v5e).
    if q_tile is None:
        q_tile = T if T <= 256 else 256
    assert T % q_tile == 0
    num_q_tiles = T // q_tile

    cdt = jnp.dtype(compute_dtype)
    x_c = x.astype(cdt)
    wq = params["wq"].astype(cdt)
    w_kv = jnp.concatenate([params["wk"], params["wv"]], axis=1).astype(cdt)   # (C, 2C)
    wp = params["wp"].astype(cdt)
    bq = params["bq"].astype(jnp.float32)
    b_kv = jnp.concatenate([params["bk"], params["bv"]], axis=1).astype(jnp.float32)
    bp = params["bp"].astype(jnp.float32)

    kernel = functools.partial(mha_kernel, num_heads=num_heads,
                               head_size=head_size, scale=scale, q_tile=q_tile)

    # Advisory cost estimate for XLA's scheduler (attention counted un-skipped).
    H, Hs = num_heads, head_size
    flops = (2 * B * T * C * C                 # Q projection
             + 2 * B * T * C * (2 * C)         # KV projection
             + 2 * 2 * B * H * T * T * Hs      # scores + p@v
             + 2 * B * T * C * C)              # output projection
    transcendentals = B * H * T * T
    bytes_accessed = (x_c.size * cdt.itemsize
                      + (wq.size + w_kv.size + wp.size) * cdt.itemsize
                      + (bq.size + b_kv.size + bp.size) * 4
                      + B * T * C * x.dtype.itemsize)

    out = pl.pallas_call(
        kernel,
        out_shape=jax.ShapeDtypeStruct((B, T, C), x.dtype),
        grid_spec=pltpu.PrefetchScalarGridSpec(
            num_scalar_prefetch=0,
            grid=(B, num_q_tiles),
            in_specs=[
                pl.BlockSpec((1, T, C),  lambda b, qi: (b, 0, 0)),   # x (full seq, DMA'd once per batch)
                pl.BlockSpec((C, C),     lambda b, qi: (0, 0)),      # Wq (all heads)
                pl.BlockSpec((1, C),     lambda b, qi: (0, 0)),      # bq
                pl.BlockSpec((C, 2 * C), lambda b, qi: (0, 0)),      # Wk|Wv
                pl.BlockSpec((1, 2 * C), lambda b, qi: (0, 0)),      # bk|bv
                pl.BlockSpec((C, C),     lambda b, qi: (0, 0)),      # Wp
                pl.BlockSpec((1, C),     lambda b, qi: (0, 0)),      # bp
            ],
            out_specs=pl.BlockSpec((1, q_tile, C),
                                   lambda b, qi: (b, qi, 0)),        # lane-dense (.., C)
            scratch_shapes=[
                pltpu.VMEM((T, 2 * C), cdt),           # cached K|V for the current batch
                pltpu.VMEM((q_tile, C), jnp.float32),  # per-head output accumulator
            ],
        ),
        compiler_params=pltpu.CompilerParams(
            # qi MUST be "arbitrary": the KV scratch written at qi==0 is reused by
            # later qi steps of the same batch.  Batch stays "parallel" (megacore).
            dimension_semantics=("parallel", "arbitrary"),
            vmem_limit_bytes=48 * 1024 * 1024,
        ),
        cost_estimate=pl.CostEstimate(flops=flops,
                                      transcendentals=transcendentals,
                                      bytes_accessed=bytes_accessed),
    )(x_c, wq, bq, w_kv, b_kv, wp, bp)

    return out


# -----------------------------------------------------------------------------
# Deterministic parameter init (PyTorch nn.Linear-style uniform bounds).
# Per-head q/k/v Linears are stored packed along the output dim:
#   wq[:, h*Hs:(h+1)*Hs] is head h's query weight (transposed vs. torch's (out,in)).
# -----------------------------------------------------------------------------
def init_params(key, num_heads, head_size):
    n_embed = num_heads * head_size
    ks = jax.random.split(key, 8)
    bound = 1.0 / math.sqrt(n_embed)

    def u(k, shape):
        return jax.random.uniform(k, shape, jnp.float32, -bound, bound)

    return {
        "wq": u(ks[0], (n_embed, n_embed)),
        "wk": u(ks[1], (n_embed, n_embed)),
        "wv": u(ks[2], (n_embed, n_embed)),
        "bq": u(ks[3], (1, n_embed)),
        "bk": u(ks[4], (1, n_embed)),
        "bv": u(ks[5], (1, n_embed)),
        "wp": u(ks[6], (n_embed, n_embed)),
        "bp": u(ks[7], (1, n_embed)),
    }


# -----------------------------------------------------------------------------
# Pure-JAX reference (mirrors the PyTorch forward, dropout = identity), f32.
# -----------------------------------------------------------------------------
def reference(x, params, num_heads, head_size):
    B, T, C = x.shape
    scale = C ** (-0.5)
    outs = []
    for h in range(num_heads):
        sl = slice(h * head_size, (h + 1) * head_size)
        q = x @ params["wq"][:, sl] + params["bq"][:, sl]
        k = x @ params["wk"][:, sl] + params["bk"][:, sl]
        v = x @ params["wv"][:, sl] + params["bv"][:, sl]
        w = jnp.einsum("btd,bsd->bts", q, k) * scale
        mask = jnp.tril(jnp.ones((T, T), bool))
        w = jnp.where(mask, w, -jnp.inf)
        w = jax.nn.softmax(w, axis=-1)
        outs.append(jnp.einsum("bts,bsd->btd", w, v))
    y = jnp.concatenate(outs, axis=-1)
    return y @ params["wp"] + params["bp"]


if __name__ == "__main__":
    num_heads, head_size = 4, 8
    n_embed = num_heads * head_size

    key = jax.random.PRNGKey(0)
    kp, kx1, kx2 = jax.random.split(key, 3)
    params = init_params(kp, num_heads, head_size)

    # Case 1: single query tile (T == q_tile).
    B, T = 2, 8
    x1 = jax.random.normal(kx1, (B, T, n_embed), jnp.float32)
    ref1 = reference(x1, params, num_heads, head_size)

    out_f32 = multi_head_attention(x1, params, num_heads, head_size,
                                   compute_dtype=jnp.float32)
    out_f32 = jax.block_until_ready(out_f32)
    assert out_f32.shape == (B, T, n_embed)
    assert jnp.allclose(out_f32, ref1, atol=5e-3, rtol=5e-3), "f32 mismatch vs reference"

    out_bf16 = multi_head_attention(x1, params, num_heads, head_size)   # bf16 compute
    out_bf16 = jax.block_until_ready(out_bf16)
    assert jnp.allclose(out_bf16, ref1, atol=5e-2, rtol=5e-2), "bf16 mismatch vs reference"

    # Case 2: multiple query tiles -> exercises KV-scratch caching + causal KV loop.
    B2, T2 = 2, 16
    x2 = jax.random.normal(kx2, (B2, T2, n_embed), jnp.float32)
    ref2 = reference(x2, params, num_heads, head_size)
    out2 = multi_head_attention(x2, params, num_heads, head_size, q_tile=8,
                                compute_dtype=jnp.float32)
    out2 = jax.block_until_ready(out2)
    assert jnp.allclose(out2, ref2, atol=5e-3, rtol=5e-3), "multi-tile mismatch vs reference"

    print("KERNEL_OK")
</pallas_src>

<mosaic_0001>
module attributes {stable_mosaic.version = 11 : i64} {
  func.func @mha_kernel(%arg0: i32, %arg1: i32, %arg2: memref<1x8x32xf32, #tpu.memory_space<vmem>>, %arg3: memref<32x32xf32, #tpu.memory_space<vmem>>, %arg4: memref<1x32xf32, #tpu.memory_space<vmem>>, %arg5: memref<32x64xf32, #tpu.memory_space<vmem>>, %arg6: memref<1x64xf32, #tpu.memory_space<vmem>>, %arg7: memref<32x32xf32, #tpu.memory_space<vmem>>, %arg8: memref<1x32xf32, #tpu.memory_space<vmem>>, %arg9: memref<1x8x32xf32, #tpu.memory_space<vmem>>, %arg10: memref<8x64xf32, #tpu.memory_space<vmem>>, %arg11: memref<8x32xf32, #tpu.memory_space<vmem>>) attributes {dimension_semantics = [#tpu.dimension_semantics<parallel>, #tpu.dimension_semantics<arbitrary>], iteration_bounds = array<i64: 2, 1>, scalar_prefetch = 0 : i64, scratch_operands = 2 : i64, tpu.core_type = #tpu.core_type<tc>, window_params = [{transform_indices = @transform_0, window_bounds = array<i64: 1, 8, 32>}, {pipeline_mode = #tpu.pipeline_mode<synchronous>, transform_indices = @transform_1, window_bounds = array<i64: 32, 32>}, {pipeline_mode = #tpu.pipeline_mode<synchronous>, transform_indices = @transform_2, window_bounds = array<i64: 1, 32>}, {pipeline_mode = #tpu.pipeline_mode<synchronous>, transform_indices = @transform_3, window_bounds = array<i64: 32, 64>}, {pipeline_mode = #tpu.pipeline_mode<synchronous>, transform_indices = @transform_4, window_bounds = array<i64: 1, 64>}, {pipeline_mode = #tpu.pipeline_mode<synchronous>, transform_indices = @transform_5, window_bounds = array<i64: 32, 32>}, {pipeline_mode = #tpu.pipeline_mode<synchronous>, transform_indices = @transform_6, window_bounds = array<i64: 1, 32>}, {transform_indices = @transform_7, window_bounds = array<i64: 1, 8, 32>}]} {
    %c0_i32 = arith.constant 0 : i32
    %0 = arith.cmpi eq, %arg1, %c0_i32 : i32
    %1 = arith.extui %0 : i1 to i32
    %c0_i32_0 = arith.constant 0 : i32
    %2 = arith.cmpi ne, %1, %c0_i32_0 : i32
    scf.if %2 {
      %c0_46 = arith.constant 0 : index
      %c0_47 = arith.constant 0 : index
      %c0_48 = arith.constant 0 : index
      %72 = vector.load %arg2[%c0_46, %c0_47, %c0_48] : memref<1x8x32xf32, #tpu.memory_space<vmem>>, vector<1x8x32xf32>
      %73 = vector.shape_cast %72 : vector<1x8x32xf32> to vector<8x32xf32>
      %c0_49 = arith.constant 0 : index
      %c0_50 = arith.constant 0 : index
      %74 = vector.load %arg5[%c0_49, %c0_50] : memref<32x64xf32, #tpu.memory_space<vmem>>, vector<32x64xf32>
      %cst_51 = arith.constant dense<0.000000e+00> : vector<8x64xf32>
      %75 = tpu.matmul %73, %74, %cst_51 {dimension_numbers = #tpu.dot_dimension_numbers<[1], [0], [0], [1], [0, 0, 1, 1], [], []>} : vector<8x32xf32>, vector<32x64xf32>, vector<8x64xf32> -> vector<8x64xf32>
      %c0_52 = arith.constant 0 : index
      %c0_53 = arith.constant 0 : index
      %76 = vector.load %arg6[%c0_52, %c0_53] : memref<1x64xf32, #tpu.memory_space<vmem>>, vector<1x64xf32>
      %77 = vector.broadcast %76 : vector<1x64xf32> to vector<8x64xf32>
      %78 = arith.addf %75, %77 : vector<8x64xf32>
      %c0_54 = arith.constant 0 : index
      %c0_55 = arith.constant 0 : index
      %79 = vector.load %arg10[%c0_54, %c0_55] : memref<8x64xf32, #tpu.memory_space<vmem>>, vector<8x64xf32>
      tpu.vector_store %arg10[%c0_54, %c0_55], %78 {strides = array<i32>} : memref<8x64xf32, #tpu.memory_space<vmem>>, vector<8x64xf32>,
    } else {
    }
    %c8_i32 = arith.constant 8 : i32
    %3 = arith.muli %arg1, %c8_i32 : i32
    %4 = tpu.assume_multiple %3, 8 : i32
    %c0 = arith.constant 0 : index
    %5 = arith.index_cast %4 : i32 to index
    %c0_1 = arith.constant 0 : index
    %6 = vector.load %arg2[%c0, %5, %c0_1] : memref<1x8x32xf32, #tpu.memory_space<vmem>>, vector<1x8x32xf32>
    %7 = vector.shape_cast %6 : vector<1x8x32xf32> to vector<8x32xf32>
    %c0_2 = arith.constant 0 : index
    %c0_3 = arith.constant 0 : index
    %8 = vector.load %arg3[%c0_2, %c0_3] : memref<32x32xf32, #tpu.memory_space<vmem>>, vector<32x32xf32>
    %cst = arith.constant dense<0.000000e+00> : vector<8x32xf32>
    %9 = tpu.matmul %7, %8, %cst {dimension_numbers = #tpu.dot_dimension_numbers<[1], [0], [0], [1], [0, 0, 1, 1], [], []>} : vector<8x32xf32>, vector<32x32xf32>, vector<8x32xf32> -> vector<8x32xf32>
    %c0_4 = arith.constant 0 : index
    %c0_5 = arith.constant 0 : index
    %10 = vector.load %arg4[%c0_4, %c0_5] : memref<1x32xf32, #tpu.memory_space<vmem>>, vector<1x32xf32>
    %11 = vector.broadcast %10 : vector<1x32xf32> to vector<8x32xf32>
    %12 = arith.addf %9, %11 : vector<8x32xf32>
    %cst_6 = arith.constant 0.176776692 : f32
    %13 = vector.broadcast %cst_6 : f32 to vector<8x32xf32>
    %14 = arith.mulf %12, %13 : vector<8x32xf32>
    %15 = tpu.iota {dimensions = array<i32: 0>} : vector<8x8xi32>
    %16 = tpu.iota {dimensions = array<i32: 1>} : vector<8x8xi32>
    %17 = arith.cmpi sge, %15, %16 : vector<8x8xi32>
    %c1_i32 = arith.constant 1 : i32
    %18 = arith.addi %arg1, %c1_i32 : i32
    %19 = vector.extract_strided_slice %14 {offsets = [0, 0], sizes = [8, 8], strides = [1, 1]} : vector<8x32xf32> to vector<8x8xf32>
    %cst_7 = arith.constant -1.000000e+30 : f32
    %20 = vector.broadcast %cst_7 : f32 to vector<8x1xf32>
    %cst_8 = arith.constant 0.000000e+00 : f32
    %21 = vector.broadcast %cst_8 : f32 to vector<8x1xf32>
    %cst_9 = arith.constant 0.000000e+00 : f32
    %22 = vector.broadcast %cst_9 : f32 to vector<8x8xf32>
    %cst_10 = arith.constant -1.000000e+30 : f32
    %c0_i32_11 = arith.constant 0 : i32
    %23 = arith.subi %18, %c0_i32_11 : i32
    %24 = arith.addi %c0_i32_11, %23 : i32
    %c1_i32_12 = arith.constant 1 : i32
    %25:3 = scf.for %arg12 = %c0_i32_11 to %24 step %c1_i32_12 iter_args(%arg13 = %20, %arg14 = %21, %arg15 = %22) -> (vector<8x1xf32>, vector<8x1xf32>, vector<8x8xf32>)  : i32 {
      %c8_i32_46 = arith.constant 8 : i32
      %72 = arith.muli %arg12, %c8_i32_46 : i32
      %73 = tpu.assume_multiple %72, 8 : i32
      %74 = arith.index_cast %73 : i32 to index
      %c0_47 = arith.constant 0 : index
      %75 = vector.load %arg10[%74, %c0_47] : memref<8x64xf32, #tpu.memory_space<vmem>>, vector<8x8xf32>
      %76 = arith.index_cast %73 : i32 to index
      %c32 = arith.constant 32 : index
      %77 = vector.load %arg10[%76, %c32] : memref<8x64xf32, #tpu.memory_space<vmem>>, vector<8x8xf32>
      %cst_48 = arith.constant dense<0.000000e+00> : vector<8x8xf32>
      %78 = tpu.matmul %19, %75, %cst_48 {dimension_numbers = #tpu.dot_dimension_numbers<[1], [1], [0], [0], [0, 0, 1, 0], [], []>} : vector<8x8xf32>, vector<8x8xf32>, vector<8x8xf32> -> vector<8x8xf32>
      %79 = arith.cmpi slt, %arg12, %arg1 : i32
      %80 = vector.broadcast %79 : i1 to vector<8x8xi1>
      %81 = arith.ori %80, %17 : vector<8x8xi1>
      %82 = vector.broadcast %cst_10 : f32 to vector<8x8xf32>
      %83 = arith.select %81, %78, %82 : vector<8x8xi1>, vector<8x8xf32>
      %cst_49 = arith.constant dense<0xFF800000> : vector<8xf32>
      %84 = vector.multi_reduction <maximumf>, %83, %cst_49 [1] : vector<8x8xf32> to vector<8xf32>
      %85 = vector.shape_cast %84 : vector<8xf32> to vector<8x1xf32>
      %86 = arith.maximumf %arg13, %85 : vector<8x1xf32>
      %87 = arith.subf %arg13, %86 : vector<8x1xf32>
      %88 = math.exp %87 : vector<8x1xf32>
      %89 = vector.broadcast %86 : vector<8x1xf32> to vector<8x8xf32>
      %90 = arith.subf %83, %89 : vector<8x8xf32>
      %91 = math.exp %90 : vector<8x8xf32>
      %92 = arith.mulf %88, %arg14 : vector<8x1xf32>
      %cst_50 = arith.constant dense<0.000000e+00> : vector<8xf32>
      %93 = vector.multi_reduction <add>, %91, %cst_50 [1] : vector<8x8xf32> to vector<8xf32>
      %94 = vector.shape_cast %93 : vector<8xf32> to vector<8x1xf32>
      %95 = arith.addf %92, %94 : vector<8x1xf32>
      %96 = vector.broadcast %88 : vector<8x1xf32> to vector<8x8xf32>
      %97 = arith.mulf %96, %arg15 : vector<8x8xf32>
      %cst_51 = arith.constant dense<0.000000e+00> : vector<8x8xf32>
      %98 = tpu.matmul %91, %77, %cst_51 {dimension_numbers = #tpu.dot_dimension_numbers<[1], [0], [0], [1], [0, 0, 1, 1], [], []>} : vector<8x8xf32>, vector<8x8xf32>, vector<8x8xf32> -> vector<8x8xf32>
      %99 = arith.addf %97, %98 : vector<8x8xf32>
      scf.yield %86, %95, %99 : vector<8x1xf32>, vector<8x1xf32>, vector<8x8xf32>
    }
    %26 = tpu.reciprocal %25#1 {approx = true} : vector<8x1xf32> -> vector<8x1xf32>
    %27 = vector.broadcast %26 : vector<8x1xf32> to vector<8x8xf32>
    %28 = arith.mulf %25#2, %27 : vector<8x8xf32>
    %c0_13 = arith.constant 0 : index
    %c0_14 = arith.constant 0 : index
    %29 = vector.load %arg11[%c0_13, %c0_14] : memref<8x32xf32, #tpu.memory_space<vmem>>, vector<8x8xf32>
    tpu.vector_store %arg11[%c0_13, %c0_14], %28 {strides = array<i32>} : memref<8x32xf32, #tpu.memory_space<vmem>>, vector<8x8xf32>,
    %30 = vector.extract_strided_slice %14 {offsets = [0, 8], sizes = [8, 8], strides = [1, 1]} : vector<8x32xf32> to vector<8x8xf32>
    %cst_15 = arith.constant -1.000000e+30 : f32
    %31 = vector.broadcast %cst_15 : f32 to vector<8x1xf32>
    %cst_16 = arith.constant 0.000000e+00 : f32
    %32 = vector.broadcast %cst_16 : f32 to vector<8x1xf32>
    %cst_17 = arith.constant 0.000000e+00 : f32
    %33 = vector.broadcast %cst_17 : f32 to vector<8x8xf32>
    %cst_18 = arith.constant -1.000000e+30 : f32
    %c0_i32_19 = arith.constant 0 : i32
    %34 = arith.subi %18, %c0_i32_19 : i32
    %35 = arith.addi %c0_i32_19, %34 : i32
    %c1_i32_20 = arith.constant 1 : i32
    %36:3 = scf.for %arg12 = %c0_i32_19 to %35 step %c1_i32_20 iter_args(%arg13 = %31, %arg14 = %32, %arg15 = %33) -> (vector<8x1xf32>, vector<8x1xf32>, vector<8x8xf32>)  : i32 {
      %c8_i32_46 = arith.constant 8 : i32
      %72 = arith.muli %arg12, %c8_i32_46 : i32
      %73 = tpu.assume_multiple %72, 8 : i32
      %74 = arith.index_cast %73 : i32 to index
      %c8_47 = arith.constant 8 : index
      %75 = vector.load %arg10[%74, %c8_47] : memref<8x64xf32, #tpu.memory_space<vmem>>, vector<8x8xf32>
      %76 = arith.index_cast %73 : i32 to index
      %c40 = arith.constant 40 : index
      %77 = vector.load %arg10[%76, %c40] : memref<8x64xf32, #tpu.memory_space<vmem>>, vector<8x8xf32>
      %cst_48 = arith.constant dense<0.000000e+00> : vector<8x8xf32>
      %78 = tpu.matmul %30, %75, %cst_48 {dimension_numbers = #tpu.dot_dimension_numbers<[1], [1], [0], [0], [0, 0, 1, 0], [], []>} : vector<8x8xf32>, vector<8x8xf32>, vector<8x8xf32> -> vector<8x8xf32>
      %79 = arith.cmpi slt, %arg12, %arg1 : i32
      %80 = vector.broadcast %79 : i1 to vector<8x8xi1>
      %81 = arith.ori %80, %17 : vector<8x8xi1>
      %82 = vector.broadcast %cst_18 : f32 to vector<8x8xf32>
      %83 = arith.select %81, %78, %82 : vector<8x8xi1>, vector<8x8xf32>
      %cst_49 = arith.constant dense<0xFF800000> : vector<8xf32>
      %84 = vector.multi_reduction <maximumf>, %83, %cst_49 [1] : vector<8x8xf32> to vector<8xf32>
      %85 = vector.shape_cast %84 : vector<8xf32> to vector<8x1xf32>
      %86 = arith.maximumf %arg13, %85 : vector<8x1xf32>
      %87 = arith.subf %arg13, %86 : vector<8x1xf32>
      %88 = math.exp %87 : vector<8x1xf32>
      %89 = vector.broadcast %86 : vector<8x1xf32> to vector<8x8xf32>
      %90 = arith.subf %83, %89 : vector<8x8xf32>
      %91 = math.exp %90 : vector<8x8xf32>
      %92 = arith.mulf %88, %arg14 : vector<8x1xf32>
      %cst_50 = arith.constant dense<0.000000e+00> : vector<8xf32>
      %93 = vector.multi_reduction <add>, %91, %cst_50 [1] : vector<8x8xf32> to vector<8xf32>
      %94 = vector.shape_cast %93 : vector<8xf32> to vector<8x1xf32>
      %95 = arith.addf %92, %94 : vector<8x1xf32>
      %96 = vector.broadcast %88 : vector<8x1xf32> to vector<8x8xf32>
      %97 = arith.mulf %96, %arg15 : vector<8x8xf32>
      %cst_51 = arith.constant dense<0.000000e+00> : vector<8x8xf32>
      %98 = tpu.matmul %91, %77, %cst_51 {dimension_numbers = #tpu.dot_dimension_numbers<[1], [0], [0], [1], [0, 0, 1, 1], [], []>} : vector<8x8xf32>, vector<8x8xf32>, vector<8x8xf32> -> vector<8x8xf32>
      %99 = arith.addf %97, %98 : vector<8x8xf32>
      scf.yield %86, %95, %99 : vector<8x1xf32>, vector<8x1xf32>, vector<8x8xf32>
    }
    %37 = tpu.reciprocal %36#1 {approx = true} : vector<8x1xf32> -> vector<8x1xf32>
    %38 = vector.broadcast %37 : vector<8x1xf32> to vector<8x8xf32>
    %39 = arith.mulf %36#2, %38 : vector<8x8xf32>
    %c0_21 = arith.constant 0 : index
    %c8 = arith.constant 8 : index
    %40 = vector.load %arg11[%c0_21, %c8] : memref<8x32xf32, #tpu.memory_space<vmem>>, vector<8x8xf32>
    tpu.vector_store %arg11[%c0_21, %c8], %39 {strides = array<i32>} : memref<8x32xf32, #tpu.memory_space<vmem>>, vector<8x8xf32>,
    %41 = vector.extract_strided_slice %14 {offsets = [0, 16], sizes = [8, 8], strides = [1, 1]} : vector<8x32xf32> to vector<8x8xf32>
    %cst_22 = arith.constant -1.000000e+30 : f32
    %42 = vector.broadcast %cst_22 : f32 to vector<8x1xf32>
    %cst_23 = arith.constant 0.000000e+00 : f32
    %43 = vector.broadcast %cst_23 : f32 to vector<8x1xf32>
    %cst_24 = arith.constant 0.000000e+00 : f32
    %44 = vector.broadcast %cst_24 : f32 to vector<8x8xf32>
    %cst_25 = arith.constant -1.000000e+30 : f32
    %c0_i32_26 = arith.constant 0 : i32
    %45 = arith.subi %18, %c0_i32_26 : i32
    %46 = arith.addi %c0_i32_26, %45 : i32
    %c1_i32_27 = arith.constant 1 : i32
    %47:3 = scf.for %arg12 = %c0_i32_26 to %46 step %c1_i32_27 iter_args(%arg13 = %42, %arg14 = %43, %arg15 = %44) -> (vector<8x1xf32>, vector<8x1xf32>, vector<8x8xf32>)  : i32 {
      %c8_i32_46 = arith.constant 8 : i32
      %72 = arith.muli %arg12, %c8_i32_46 : i32
      %73 = tpu.assume_multiple %72, 8 : i32
      %74 = arith.index_cast %73 : i32 to index
      %c16_47 = arith.constant 16 : index
      %75 = vector.load %arg10[%74, %c16_47] : memref<8x64xf32, #tpu.memory_space<vmem>>, vector<8x8xf32>
      %76 = arith.index_cast %73 : i32 to index
      %c48 = arith.constant 48 : index
      %77 = vector.load %arg10[%76, %c48] : memref<8x64xf32, #tpu.memory_space<vmem>>, vector<8x8xf32>
      %cst_48 = arith.constant dense<0.000000e+00> : vector<8x8xf32>
      %78 = tpu.matmul %41, %75, %cst_48 {dimension_numbers = #tpu.dot_dimension_numbers<[1], [1], [0], [0], [0, 0, 1, 0], [], []>} : vector<8x8xf32>, vector<8x8xf32>, vector<8x8xf32> -> vector<8x8xf32>
      %79 = arith.cmpi slt, %arg12, %arg1 : i32
      %80 = vector.broadcast %79 : i1 to vector<8x8xi1>
      %81 = arith.ori %80, %17 : vector<8x8xi1>
      %82 = vector.broadcast %cst_25 : f32 to vector<8x8xf32>
      %83 = arith.select %81, %78, %82 : vector<8x8xi1>, vector<8x8xf32>
      %cst_49 = arith.constant dense<0xFF800000> : vector<8xf32>
      %84 = vector.multi_reduction <maximumf>, %83, %cst_49 [1] : vector<8x8xf32> to vector<8xf32>
      %85 = vector.shape_cast %84 : vector<8xf32> to vector<8x1xf32>
      %86 = arith.maximumf %arg13, %85 : vector<8x1xf32>
      %87 = arith.subf %arg13, %86 : vector<8x1xf32>
      %88 = math.exp %87 : vector<8x1xf32>
      %89 = vector.broadcast %86 : vector<8x1xf32> to vector<8x8xf32>
      %90 = arith.subf %83, %89 : vector<8x8xf32>
      %91 = math.exp %90 : vector<8x8xf32>
      %92 = arith.mulf %88, %arg14 : vector<8x1xf32>
      %cst_50 = arith.constant dense<0.000000e+00> : vector<8xf32>
      %93 = vector.multi_reduction <add>, %91, %cst_50 [1] : vector<8x8xf32> to vector<8xf32>
      %94 = vector.shape_cast %93 : vector<8xf32> to vector<8x1xf32>
      %95 = arith.addf %92, %94 : vector<8x1xf32>
      %96 = vector.broadcast %88 : vector<8x1xf32> to vector<8x8xf32>
      %97 = arith.mulf %96, %arg15 : vector<8x8xf32>
      %cst_51 = arith.constant dense<0.000000e+00> : vector<8x8xf32>
      %98 = tpu.matmul %91, %77, %cst_51 {dimension_numbers = #tpu.dot_dimension_numbers<[1], [0], [0], [1], [0, 0, 1, 1], [], []>} : vector<8x8xf32>, vector<8x8xf32>, vector<8x8xf32> -> vector<8x8xf32>
      %99 = arith.addf %97, %98 : vector<8x8xf32>
      scf.yield %86, %95, %99 : vector<8x1xf32>, vector<8x1xf32>, vector<8x8xf32>
    }
    %48 = tpu.reciprocal %47#1 {approx = true} : vector<8x1xf32> -> vector<8x1xf32>
    %49 = vector.broadcast %48 : vector<8x1xf32> to vector<8x8xf32>
    %50 = arith.mulf %47#2, %49 : vector<8x8xf32>
    %c0_28 = arith.constant 0 : index
    %c16 = arith.constant 16 : index
    %51 = vector.load %arg11[%c0_28, %c16] : memref<8x32xf32, #tpu.memory_space<vmem>>, vector<8x8xf32>
    tpu.vector_store %arg11[%c0_28, %c16], %50 {strides = array<i32>} : memref<8x32xf32, #tpu.memory_space<vmem>>, vector<8x8xf32>,
    %52 = vector.extract_strided_slice %14 {offsets = [0, 24], sizes = [8, 8], strides = [1, 1]} : vector<8x32xf32> to vector<8x8xf32>
    %cst_29 = arith.constant -1.000000e+30 : f32
    %53 = vector.broadcast %cst_29 : f32 to vector<8x1xf32>
    %cst_30 = arith.constant 0.000000e+00 : f32
    %54 = vector.broadcast %cst_30 : f32 to vector<8x1xf32>
    %cst_31 = arith.constant 0.000000e+00 : f32
    %55 = vector.broadcast %cst_31 : f32 to vector<8x8xf32>
    %cst_32 = arith.constant -1.000000e+30 : f32
    %c0_i32_33 = arith.constant 0 : i32
    %56 = arith.subi %18, %c0_i32_33 : i32
    %57 = arith.addi %c0_i32_33, %56 : i32
    %c1_i32_34 = arith.constant 1 : i32
    %58:3 = scf.for %arg12 = %c0_i32_33 to %57 step %c1_i32_34 iter_args(%arg13 = %53, %arg14 = %54, %arg15 = %55) -> (vector<8x1xf32>, vector<8x1xf32>, vector<8x8xf32>)  : i32 {
      %c8_i32_46 = arith.constant 8 : i32
      %72 = arith.muli %arg12, %c8_i32_46 : i32
      %73 = tpu.assume_multiple %72, 8 : i32
      %74 = arith.index_cast %73 : i32 to index
      %c24_47 = arith.constant 24 : index
      %75 = vector.load %arg10[%74, %c24_47] : memref<8x64xf32, #tpu.memory_space<vmem>>, vector<8x8xf32>
      %76 = arith.index_cast %73 : i32 to index
      %c56 = arith.constant 56 : index
      %77 = vector.load %arg10[%76, %c56] : memref<8x64xf32, #tpu.memory_space<vmem>>, vector<8x8xf32>
      %cst_48 = arith.constant dense<0.000000e+00> : vector<8x8xf32>
      %78 = tpu.matmul %52, %75, %cst_48 {dimension_numbers = #tpu.dot_dimension_numbers<[1], [1], [0], [0], [0, 0, 1, 0], [], []>} : vector<8x8xf32>, vector<8x8xf32>, vector<8x8xf32> -> vector<8x8xf32>
      %79 = arith.cmpi slt, %arg12, %arg1 : i32
      %80 = vector.broadcast %79 : i1 to vector<8x8xi1>
      %81 = arith.ori %80, %17 : vector<8x8xi1>
      %82 = vector.broadcast %cst_32 : f32 to vector<8x8xf32>
      %83 = arith.select %81, %78, %82 : vector<8x8xi1>, vector<8x8xf32>
      %cst_49 = arith.constant dense<0xFF800000> : vector<8xf32>
      %84 = vector.multi_reduction <maximumf>, %83, %cst_49 [1] : vector<8x8xf32> to vector<8xf32>
      %85 = vector.shape_cast %84 : vector<8xf32> to vector<8x1xf32>
      %86 = arith.maximumf %arg13, %85 : vector<8x1xf32>
      %87 = arith.subf %arg13, %86 : vector<8x1xf32>
      %88 = math.exp %87 : vector<8x1xf32>
      %89 = vector.broadcast %86 : vector<8x1xf32> to vector<8x8xf32>
      %90 = arith.subf %83, %89 : vector<8x8xf32>
      %91 = math.exp %90 : vector<8x8xf32>
      %92 = arith.mulf %88, %arg14 : vector<8x1xf32>
      %cst_50 = arith.constant dense<0.000000e+00> : vector<8xf32>
      %93 = vector.multi_reduction <add>, %91, %cst_50 [1] : vector<8x8xf32> to vector<8xf32>
      %94 = vector.shape_cast %93 : vector<8xf32> to vector<8x1xf32>
      %95 = arith.addf %92, %94 : vector<8x1xf32>
      %96 = vector.broadcast %88 : vector<8x1xf32> to vector<8x8xf32>
      %97 = arith.mulf %96, %arg15 : vector<8x8xf32>
      %cst_51 = arith.constant dense<0.000000e+00> : vector<8x8xf32>
      %98 = tpu.matmul %91, %77, %cst_51 {dimension_numbers = #tpu.dot_dimension_numbers<[1], [0], [0], [1], [0, 0, 1, 1], [], []>} : vector<8x8xf32>, vector<8x8xf32>, vector<8x8xf32> -> vector<8x8xf32>
      %99 = arith.addf %97, %98 : vector<8x8xf32>
      scf.yield %86, %95, %99 : vector<8x1xf32>, vector<8x1xf32>, vector<8x8xf32>
    }
    %59 = tpu.reciprocal %58#1 {approx = true} : vector<8x1xf32> -> vector<8x1xf32>
    %60 = vector.broadcast %59 : vector<8x1xf32> to vector<8x8xf32>
    %61 = arith.mulf %58#2, %60 : vector<8x8xf32>
    %c0_35 = arith.constant 0 : index
    %c24 = arith.constant 24 : index
    %62 = vector.load %arg11[%c0_35, %c24] : memref<8x32xf32, #tpu.memory_space<vmem>>, vector<8x8xf32>
    tpu.vector_store %arg11[%c0_35, %c24], %61 {strides = array<i32>} : memref<8x32xf32, #tpu.memory_space<vmem>>, vector<8x8xf32>,
    %c0_36 = arith.constant 0 : index
    %c0_37 = arith.constant 0 : index
    %63 = vector.load %arg11[%c0_36, %c0_37] : memref<8x32xf32, #tpu.memory_space<vmem>>, vector<8x32xf32>
    %c0_38 = arith.constant 0 : index
    %c0_39 = arith.constant 0 : index
    %64 = vector.load %arg7[%c0_38, %c0_39] : memref<32x32xf32, #tpu.memory_space<vmem>>, vector<32x32xf32>
    %cst_40 = arith.constant dense<0.000000e+00> : vector<8x32xf32>
    %65 = tpu.matmul %63, %64, %cst_40 {dimension_numbers = #tpu.dot_dimension_numbers<[1], [0], [0], [1], [0, 0, 1, 1], [], []>} : vector<8x32xf32>, vector<32x32xf32>, vector<8x32xf32> -> vector<8x32xf32>
    %c0_41 = arith.constant 0 : index
    %c0_42 = arith.constant 0 : index
    %66 = vector.load %arg8[%c0_41, %c0_42] : memref<1x32xf32, #tpu.memory_space<vmem>>, vector<1x32xf32>
    %67 = vector.broadcast %66 : vector<1x32xf32> to vector<8x32xf32>
    %68 = arith.addf %65, %67 : vector<8x32xf32>
    %c0_43 = arith.constant 0 : index
    %c0_44 = arith.constant 0 : index
    %c0_45 = arith.constant 0 : index
    %69 = vector.load %arg9[%c0_43, %c0_44, %c0_45] : memref<1x8x32xf32, #tpu.memory_space<vmem>>, vector<1x8x32xf32>
    %70 = vector.shape_cast %69 : vector<1x8x32xf32> to vector<8x32xf32>
    %71 = vector.shape_cast %68 : vector<8x32xf32> to vector<1x8x32xf32>
    tpu.vector_store %arg9[%c0_43, %c0_44, %c0_45], %71 {strides = array<i32>} : memref<1x8x32xf32, #tpu.memory_space<vmem>>, vector<1x8x32xf32>,
    return
  }
  func.func @transform_0(%arg0: i32, %arg1: i32) -> (i32, i32, i32) {
    %c0_i32 = arith.constant 0 : i32
    %c0_i32_0 = arith.constant 0 : i32
    %c0_i32_1 = arith.constant 0 : i32
    return %arg0, %c0_i32, %c0_i32_0 : i32, i32, i32
  }
  func.func @transform_1(%arg0: i32, %arg1: i32) -> (i32, i32) {
    %c0_i32 = arith.constant 0 : i32
    %c0_i32_0 = arith.constant 0 : i32
    %c0_i32_1 = arith.constant 0 : i32
    return %c0_i32, %c0_i32_0 : i32, i32
  }
  func.func @transform_2(%arg0: i32, %arg1: i32) -> (i32, i32) {
    %c0_i32 = arith.constant 0 : i32
    %c0_i32_0 = arith.constant 0 : i32
    %c0_i32_1 = arith.constant 0 : i32
    return %c0_i32, %c0_i32_0 : i32, i32
  }
  func.func @transform_3(%arg0: i32, %arg1: i32) -> (i32, i32) {
    %c0_i32 = arith.constant 0 : i32
    %c0_i32_0 = arith.constant 0 : i32
    %c0_i32_1 = arith.constant 0 : i32
    return %c0_i32, %c0_i32_0 : i32, i32
  }
  func.func @transform_4(%arg0: i32, %arg1: i32) -> (i32, i32) {
    %c0_i32 = arith.constant 0 : i32
    %c0_i32_0 = arith.constant 0 : i32
    %c0_i32_1 = arith.constant 0 : i32
    return %c0_i32, %c0_i32_0 : i32, i32
  }
  func.func @transform_5(%arg0: i32, %arg1: i32) -> (i32, i32) {
    %c0_i32 = arith.constant 0 : i32
    %c0_i32_0 = arith.constant 0 : i32
    %c0_i32_1 = arith.constant 0 : i32
    return %c0_i32, %c0_i32_0 : i32, i32
  }
  func.func @transform_6(%arg0: i32, %arg1: i32) -> (i32, i32) {
    %c0_i32 = arith.constant 0 : i32
    %c0_i32_0 = arith.constant 0 : i32
    %c0_i32_1 = arith.constant 0 : i32
    return %c0_i32, %c0_i32_0 : i32, i32
  }
  func.func @transform_7(%arg0: i32, %arg1: i32) -> (i32, i32, i32) {
    %c0_i32 = arith.constant 0 : i32
    %c0_i32_0 = arith.constant 0 : i32
    return %arg0, %arg1, %c0_i32 : i32, i32, i32
  }
}

</mosaic_0001>

<llo_original>
// kernel: tpu_custom_call.1
$region0: #{tpu_custom_call.1}
  #allocation0 [shape = 'u32[]', space=smem, size = 0x4, offset = 0x4, fixed_abs, tag = 'smem constant byte address 0x4 - core index']
  #allocation1 [shape = 'u32[144,128]{1,0:T(1,128)}', space=vmem, size = 0x12000, scoped, tag = 'internal scratch']
  #allocation2 [shape = 'f32[8,64]{1,0:T(8,128)}', space=vmem, size = 0x1000, scoped, tag = 'scratch operand']
  #allocation3 [shape = 'f32[8,32]{1,0:T(8,128)}', space=vmem, size = 0x1000, scoped, tag = 'scratch operand']
  %s0 = inlined_call_operand.hbm [shape: f32[2,8,32], index: 0, kind: input, shape index: {}]
  %s1 = inlined_call_operand.hbm [shape: f32[32,32], index: 1, kind: input, shape index: {}]
  %s2 = inlined_call_operand.vmem [shape: f32[1,32], index: 2, kind: input, shape index: {}]
  %s3 = inlined_call_operand.hbm [shape: f32[32,64], index: 3, kind: input, shape index: {}]
  %s4 = inlined_call_operand.vmem [shape: f32[1,64], index: 4, kind: input, shape index: {}]
  %s5 = inlined_call_operand.hbm [shape: f32[32,32], index: 5, kind: input, shape index: {}]
  %s6 = inlined_call_operand.vmem [shape: f32[1,32], index: 6, kind: input, shape index: {}]
  %s7 = inlined_call_operand.hbm [shape: f32[2,8,32], index: 7, kind: output, shape index: {}]
  %s8 = sld [smem:[#allocation0]]
  $region109: #{tpu_custom_call.1} parent=0
    _
  %s10 = ssub.s32 1, %s8
  %s11 = scalar_select 0, %s10, %s8
  $region1: #{tpu_custom_call.1} parent=0
    #allocation4 [shape = 'u8[8192]{0}', space=vmem, size = 0x2000, scoped, tag = 'input window, operand 0']
    #allocation5 [shape = 's32[2]{0}', space=sflag, size = 0x8, scoped, tag = 'scoped memory for tpu_custom_call.1']
    #allocation6 [shape = 's32[2]{0}', space=sflag, size = 0x8, scoped, tag = 'scoped memory for tpu_custom_call.1']
    #allocation7 [shape = 'u8[16384]{0}', space=vmem, size = 0x4000, scoped, tag = 'input window, operand 1, single buffered']
    #allocation8 [shape = 's32[1]{0}', space=sflag, size = 0x4, scoped, tag = 'scoped memory for tpu_custom_call.1']
    #allocation9 [shape = 'u8[16384]{0}', space=vmem, size = 0x4000, scoped, tag = 'input window, operand 3, single buffered']
    #allocation10 [shape = 'u8[16384]{0}', space=vmem, size = 0x4000, scoped, tag = 'input window, operand 5, single buffered']
    #allocation11 [shape = 's32[1]{0}', space=sflag, size = 0x4, scoped, tag = 'scoped memory for tpu_custom_call.1']
    #allocation12 [shape = 'u8[8192]{0}', space=vmem, size = 0x2000, scoped, tag = 'output window, operand 0']
    %12 = vsyncpa [#allocation5], 0
    %s13 = scalar_lea.sflag [#allocation5], 1
    %14 = vsyncpa %s13, 0
    %15 = vsyncpa [#allocation8], 0
    %16 = vsyncpa [#allocation11], 0
    %17 = vsyncpa [#allocation6], 0
    %s18 = scalar_lea.sflag [#allocation6], 1
    %19 = vsyncpa %s18, 0
    loop: start=0, step=1, limit=4
    $region2: #{tpu_custom_call.1} parent=1 // loop_pre_header
      _
    $region3: #{tpu_custom_call.1} parent=1 // loop_header
      %s21 = sphi 0, %s25
      %p22 = scmp.ge.s32.totalorder %s21, 4
      %s28 = sphi 0, %s40
      %s29 = sphi 0, %s36
      %s30 = sphi 0, %s28
      %s31 = sphi 0, %s29
      %s32 = sphi 0, %s30
      %s33 = sphi 0, %s31
      %s43 = sphi 0, %s45
      %s46 = sphi 0, %s43
      %s47 = sphi 0, %s46
      %s63 = sphi 0, %s47
      %s67 = sphi 0, %s67
      %s69 = sphi 0, %s67
      %s70 = sphi 0, %s69
      %s84 = sphi 0, %s70
      %s88 = sphi 0, %s88
      %s90 = sphi 0, %s88
      %s91 = sphi 0, %s90
      %s105 = sphi 0, %s91
      %s109 = sphi 0, %s109
      %s111 = sphi 0, %s109
      %s112 = sphi 0, %s111
      %s126 = sphi 0, %s112
      %s130 = sphi 0, %s130
      %s132 = sphi 0, %s130
      %s133 = sphi 0, %s132
      %s147 = sphi 0, %s133
      %s151 = sphi 0, %s151
      %s153 = sphi 0, %s151
      %s154 = sphi 0, %s153
      %s168 = sphi 0, %s154
      %s172 = sphi 0, %s172
      %s174 = sphi 0, %s172
      %s175 = sphi 0, %s174
      %s189 = sphi 0, %s175
      %s197 = sphi 0, %s199
      %s200 = sphi 0, %s197
      %s201 = sphi 0, %s200
      %s217 = sphi 0, %s201
    $region4: #{tpu_custom_call.1} parent=1 // loop_header_branch
      %24 = sbr.rel (%p22) target = $region8
    $region5: #{tpu_custom_call.1} parent=1 // loop_body
      %s26 = ssub.s32 %s21, 1
      %s27 = ssub.s32 %s21, 2
      %s34 = sadd.s32 1, %s29
      %p35 = scmp.ge.s32.totalorder %s34, 1
      %s36 = scalar_select %p35, 0, %s34
      %s37 = sadd.s32 1, %s28
      %s38 = scalar_select %p35, %s37, %s28
      %p39 = scmp.ge.s32.totalorder %s38, 2
      %s40 = scalar_select %p39, 0, %s38
      %s41 = ssub.s32 %s28, %s40
      %p42 = scmp.eq.s32.totalorder %s41, 0
      %s44 = sadd.s32 %s43, 1
      %s45 = scalar_select %p42, %s43, %s44
      %p48 = pneg %p42
      %p49 = scmp.eq.s32.totalorder %s21, 1
      %p50 = por %p48, %p49
      %p51 = scmp.ne.s32.totalorder %s43, %s46
      %p52 = scmp.eq.s32.totalorder %s21, 0
      %p53 = por %p51, %p52
      %p54 = scmp.ne.s32.totalorder %s43, %s46
      %p55 = scmp.eq.s32.totalorder %s26, 1
      %p56 = por %p54, %p55
      %p57 = scmp.ne.s32.totalorder %s46, %s47
      %p58 = scmp.eq.s32.totalorder %s26, 0
      %p59 = por %p57, %p58
      %p60 = scmp.ne.s32.totalorder %s46, %s47
      %p61 = scmp.eq.s32.totalorder %s27, 1
      %p62 = por %p60, %p61
      %p64 = scmp.ne.s32.totalorder %s47, %s63
      %p65 = scmp.eq.s32.totalorder %s27, 0
      %p66 = por %p64, %p65
      %s68 = sadd.s32 %s67, 1
      %p71 = scmp.eq.s32.totalorder %s21, 1
      %p72 = scmp.ne.s32.totalorder %s67, %s69
      %p73 = scmp.eq.s32.totalorder %s21, 0
      %p74 = por %p72, %p73
      %p75 = scmp.ne.s32.totalorder %s67, %s69
      %p76 = scmp.eq.s32.totalorder %s26, 1
      %p77 = por %p75, %p76
      %p78 = scmp.ne.s32.totalorder %s69, %s70
      %p79 = scmp.eq.s32.totalorder %s26, 0
      %p80 = por %p78, %p79
      %p81 = scmp.ne.s32.totalorder %s69, %s70
      %p82 = scmp.eq.s32.totalorder %s27, 1
      %p83 = por %p81, %p82
      %p85 = scmp.ne.s32.totalorder %s70, %s84
      %p86 = scmp.eq.s32.totalorder %s27, 0
      %p87 = por %p85, %p86
      %s89 = sadd.s32 %s88, 1
      %p92 = scmp.eq.s32.totalorder %s21, 1
      %p93 = scmp.ne.s32.totalorder %s88, %s90
      %p94 = scmp.eq.s32.totalorder %s21, 0
      %p95 = por %p93, %p94
      %p96 = scmp.ne.s32.totalorder %s88, %s90
      %p97 = scmp.eq.s32.totalorder %s26, 1
      %p98 = por %p96, %p97
      %p99 = scmp.ne.s32.totalorder %s90, %s91
      %p100 = scmp.eq.s32.totalorder %s26, 0
      %p101 = por %p99, %p100
      %p102 = scmp.ne.s32.totalorder %s90, %s91
      %p103 = scmp.eq.s32.totalorder %s27, 1
      %p104 = por %p102, %p103
      %p106 = scmp.ne.s32.totalorder %s91, %s105
      %p107 = scmp.eq.s32.totalorder %s27, 0
      %p108 = por %p106, %p107
      %s110 = sadd.s32 %s109, 1
      %p113 = scmp.eq.s32.totalorder %s21, 1
      %p114 = scmp.ne.s32.totalorder %s109, %s111
      %p115 = scmp.eq.s32.totalorder %s21, 0
      %p116 = por %p114, %p115
      %p117 = scmp.ne.s32.totalorder %s109, %s111
      %p118 = scmp.eq.s32.totalorder %s26, 1
      %p119 = por %p117, %p118
      %p120 = scmp.ne.s32.totalorder %s111, %s112
      %p121 = scmp.eq.s32.totalorder %s26, 0
      %p122 = por %p120, %p121
      %p123 = scmp.ne.s32.totalorder %s111, %s112
      %p124 = scmp.eq.s32.totalorder %s27, 1
      %p125 = por %p123, %p124
      %p127 = scmp.ne.s32.totalorder %s112, %s126
      %p128 = scmp.eq.s32.totalorder %s27, 0
      %p129 = por %p127, %p128
      %s131 = sadd.s32 %s130, 1
      %p134 = scmp.eq.s32.totalorder %s21, 1
      %p135 = scmp.ne.s32.totalorder %s130, %s132
      %p136 = scmp.eq.s32.totalorder %s21, 0
      %p137 = por %p135, %p136
      %p138 = scmp.ne.s32.totalorder %s130, %s132
      %p139 = scmp.eq.s32.totalorder %s26, 1
      %p140 = por %p138, %p139
      %p141 = scmp.ne.s32.totalorder %s132, %s133
      %p142 = scmp.eq.s32.totalorder %s26, 0
      %p143 = por %p141, %p142
      %p144 = scmp.ne.s32.totalorder %s132, %s133
      %p145 = scmp.eq.s32.totalorder %s27, 1
      %p146 = por %p144, %p145
      %p148 = scmp.ne.s32.totalorder %s133, %s147
      %p149 = scmp.eq.s32.totalorder %s27, 0
      %p150 = por %p148, %p149
      %s152 = sadd.s32 %s151, 1
      %p155 = scmp.eq.s32.totalorder %s21, 1
      %p156 = scmp.ne.s32.totalorder %s151, %s153
      %p157 = scmp.eq.s32.totalorder %s21, 0
      %p158 = por %p156, %p157
      %p159 = scmp.ne.s32.totalorder %s151, %s153
      %p160 = scmp.eq.s32.totalorder %s26, 1
      %p161 = por %p159, %p160
      %p162 = scmp.ne.s32.totalorder %s153, %s154
      %p163 = scmp.eq.s32.totalorder %s26, 0
      %p164 = por %p162, %p163
      %p165 = scmp.ne.s32.totalorder %s153, %s154
      %p166 = scmp.eq.s32.totalorder %s27, 1
      %p167 = por %p165, %p166
      %p169 = scmp.ne.s32.totalorder %s154, %s168
      %p170 = scmp.eq.s32.totalorder %s27, 0
      %p171 = por %p169, %p170
      %s173 = sadd.s32 %s172, 1
      %p176 = scmp.eq.s32.totalorder %s21, 1
      %p177 = scmp.ne.s32.totalorder %s172, %s174
      %p178 = scmp.eq.s32.totalorder %s21, 0
      %p179 = por %p177, %p178
      %p180 = scmp.ne.s32.totalorder %s172, %s174
      %p181 = scmp.eq.s32.totalorder %s26, 1
      %p182 = por %p180, %p181
      %p183 = scmp.ne.s32.totalorder %s174, %s175
      %p184 = scmp.eq.s32.totalorder %s26, 0
      %p185 = por %p183, %p184
      %p186 = scmp.ne.s32.totalorder %s174, %s175
      %p187 = scmp.eq.s32.totalorder %s27, 1
      %p188 = por %p186, %p187
      %p190 = scmp.ne.s32.totalorder %s175, %s189
      %p191 = scmp.eq.s32.totalorder %s27, 0
      %p192 = por %p190, %p191
      %s193 = ssub.s32 %s28, %s40
      %s194 = ssub.s32 %s29, %s36
      %s195 = sor.u32 %s193, %s194
      %p196 = scmp.eq.s32.totalorder %s195, 0
      %s198 = sadd.s32 %s197, 1
      %s199 = scalar_select %p196, %s197, %s198
      %p202 = pneg %p196
      %p203 = scmp.eq.s32.totalorder %s21, 1
      %p204 = por %p202, %p203
      %p205 = scmp.ne.s32.totalorder %s197, %s200
      %p206 = scmp.eq.s32.totalorder %s21, 0
      %p207 = por %p205, %p206
      %p208 = scmp.ne.s32.totalorder %s197, %s200
      %p209 = scmp.eq.s32.totalorder %s26, 1
      %p210 = por %p208, %p209
      %p211 = scmp.ne.s32.totalorder %s200, %s201
      %p212 = scmp.eq.s32.totalorder %s26, 0
      %p213 = por %p211, %p212
      %p214 = scmp.ne.s32.totalorder %s200, %s201
      %p215 = scmp.eq.s32.totalorder %s27, 1
      %p216 = por %p214, %p215
      %p218 = scmp.ne.s32.totalorder %s201, %s217
      %p219 = scmp.eq.s32.totalorder %s27, 0
      %p220 = por %p218, %p219
      %p221 = scmp.le.s32.totalorder 1, %s21
      %p222 = scmp.lt.s32.totalorder %s21, 3
      %p223 = pnand %p221, %p222
      %p224 = pneg %p223
      // Predicated region
      $region9: #{tpu_custom_call.1} parent=5 // pred_check
        _
      $region10: #{tpu_custom_call.1} parent=5 // pred_check_branch
        %226 = sbr.rel (%p223) target = $region12
      $region11: #{tpu_custom_call.1} parent=5 // pred_region
        %s227 = ssub.s32 %s21, 1
        // Predicated region
        $region13: #{tpu_custom_call.1} parent=11 // pred_check
          %p228 = pneg %p80
        $region14: #{tpu_custom_call.1} parent=11 // pred_check_branch
          %230 = sbr.rel (%p228) target = $region16
        $region15: #{tpu_custom_call.1} parent=11 // pred_region
          %s232 = ssub.s32 512, 512
          %233 = vsyncadd [#allocation8], %s232
          %s234 = sshll.u32 [#allocation7], 4
          %s235 = int_to_ptr.vmem [resolvable:$true] %s234
          %240 = dma.hbm_to_vmem [thread:$0]  %s1, 512, %s235, [#allocation8], 128, 128, 8
        $region16: #{tpu_custom_call.1} parent=11 // pred_fallthru
          _
        // Predicated region
        $region17: #{tpu_custom_call.1} parent=11 // pred_check
          %p241 = pneg %p101
        $region18: #{tpu_custom_call.1} parent=11 // pred_check_branch
          %243 = sbr.rel (%p241) target = $region20
        $region19: #{tpu_custom_call.1} parent=11 // pred_region
          _
        $region20: #{tpu_custom_call.1} parent=11 // pred_fallthru
          _
        // Predicated region
        $region21: #{tpu_custom_call.1} parent=11 // pred_check
          %p244 = pneg %p122
        $region22: #{tpu_custom_call.1} parent=11 // pred_check_branch
          %246 = sbr.rel (%p244) target = $region24
        $region23: #{tpu_custom_call.1} parent=11 // pred_region
          %s248 = ssub.s32 512, 512
          %249 = vsyncadd [#allocation8], %s248
          %s250 = sshll.u32 [#allocation9], 4
          %s251 = int_to_ptr.vmem [resolvable:$true] %s250
          %256 = dma.hbm_to_vmem [thread:$0]  %s3, 512, %s251, [#allocation8], 128, 128, 8
        $region24: #{tpu_custom_call.1} parent=11 // pred_fallthru
          _
        // Predicated region
        $region25: #{tpu_custom_call.1} parent=11 // pred_check
          %p257 = pneg %p143
        $region26: #{tpu_custom_call.1} parent=11 // pred_check_branch
          %259 = sbr.rel (%p257) target = $region28
        $region27: #{tpu_custom_call.1} parent=11 // pred_region
          _
        $region28: #{tpu_custom_call.1} parent=11 // pred_fallthru
          _
        // Predicated region
        $region29: #{tpu_custom_call.1} parent=11 // pred_check
          %p260 = pneg %p164
        $region30: #{tpu_custom_call.1} parent=11 // pred_check_branch
          %262 = sbr.rel (%p260) target = $region32
        $region31: #{tpu_custom_call.1} parent=11 // pred_region
          %s264 = ssub.s32 512, 512
          %265 = vsyncadd [#allocation11], %s264
          %s266 = sshll.u32 [#allocation10], 4
          %s267 = int_to_ptr.vmem [resolvable:$true] %s266
          %272 = dma.hbm_to_vmem [thread:$0]  %s5, 512, %s267, [#allocation11], 128, 128, 8
        $region32: #{tpu_custom_call.1} parent=11 // pred_fallthru
          _
        // Predicated region
        $region33: #{tpu_custom_call.1} parent=11 // pred_check
          %p273 = pneg %p185
        $region34: #{tpu_custom_call.1} parent=11 // pred_check_branch
          %275 = sbr.rel (%p273) target = $region36
        $region35: #{tpu_custom_call.1} parent=11 // pred_region
          _
        $region36: #{tpu_custom_call.1} parent=11 // pred_fallthru
          _
      $region12: #{tpu_custom_call.1} parent=5 // pred_fallthru
        _
      %p276 = scmp.lt.s32.totalorder %s21, 2
      // Predicated region
      $region37: #{tpu_custom_call.1} parent=5 // pred_check
        %p277 = pneg %p276
      $region38: #{tpu_custom_call.1} parent=5 // pred_check_branch
        %279 = sbr.rel (%p277) target = $region40
      $region39: #{tpu_custom_call.1} parent=5 // pred_region
        // Predicated region
        $region41: #{tpu_custom_call.1} parent=39 // pred_check
          %p280 = pneg %p53
        $region42: #{tpu_custom_call.1} parent=39 // pred_check_branch
          %282 = sbr.rel (%p280) target = $region44
        $region43: #{tpu_custom_call.1} parent=39 // pred_region
          %s283 = sand.u32 %s43, 1
          %s284 = scalar_lea.sflag [#allocation5], %s283
          %s285 = sand.u32 %s43, 1
          %s286 = smul.addr %s285, 8
          %s287 = scalar_lea.vmem [#allocation4], %s286
          %s289 = ssub.s32 128, 128
          %290 = vsyncadd %s284, %s289
          %s291 = smul.addr %s28, 128
          %s292 = scalar_lea.hbm %s0, %s291
          %s294 = sshll.u32 %s287, 4
          %s295 = int_to_ptr.vmem [resolvable:$true] %s294
          %297 = dma.hbm_to_vmem [thread:$0]  %s292, 128, %s295, %s284
        $region44: #{tpu_custom_call.1} parent=39 // pred_fallthru
          _
      $region40: #{tpu_custom_call.1} parent=5 // pred_fallthru
        _
      %p298 = scmp.le.s32.totalorder 1, %s21
      %p299 = scmp.lt.s32.totalorder %s21, 3
      %p300 = pnand %p298, %p299
      %p301 = pneg %p300
      // Predicated region
      $region45: #{tpu_custom_call.1} parent=5 // pred_check
        _
      $region46: #{tpu_custom_call.1} parent=5 // pred_check_branch
        %303 = sbr.rel (%p300) target = $region48
      $region47: #{tpu_custom_call.1} parent=5 // pred_region
        %s304 = ssub.s32 %s21, 1
        %s305 = sand.u32 %s46, 1
        %s306 = scalar_lea.sflag [#allocation5], %s305
        %s307 = sand.u32 %s46, 1
        %s308 = smul.addr %s307, 8
        %s309 = scalar_lea.vmem [#allocation4], %s308
        // Predicated region
        $region49: #{tpu_custom_call.1} parent=47 // pred_check
          %p310 = pneg %p59
        $region50: #{tpu_custom_call.1} parent=47 // pred_check_branch
          %312 = sbr.rel (%p310) target = $region52
        $region51: #{tpu_custom_call.1} parent=47 // pred_region
          %313 = dma.done %s306, 128
        $region52: #{tpu_custom_call.1} parent=47 // pred_fallthru
          _
        // Predicated region
        $region53: #{tpu_custom_call.1} parent=47 // pred_check
          %p314 = pneg %p80
        $region54: #{tpu_custom_call.1} parent=47 // pred_check_branch
          %316 = sbr.rel (%p314) target = $region56
        $region55: #{tpu_custom_call.1} parent=47 // pred_region
          %317 = dma.done [#allocation8], 512
        $region56: #{tpu_custom_call.1} parent=47 // pred_fallthru
          _
        // Predicated region
        $region57: #{tpu_custom_call.1} parent=47 // pred_check
          %p318 = pneg %p122
        $region58: #{tpu_custom_call.1} parent=47 // pred_check_branch
          %320 = sbr.rel (%p318) target = $region60
        $region59: #{tpu_custom_call.1} parent=47 // pred_region
          %321 = dma.done [#allocation8], 512
        $region60: #{tpu_custom_call.1} parent=47 // pred_fallthru
          _
        // Predicated region
        $region61: #{tpu_custom_call.1} parent=47 // pred_check
          %p322 = pneg %p164
        $region62: #{tpu_custom_call.1} parent=47 // pred_check_branch
          %324 = sbr.rel (%p322) target = $region64
        $region63: #{tpu_custom_call.1} parent=47 // pred_region
          %325 = dma.done [#allocation11], 512
        $region64: #{tpu_custom_call.1} parent=47 // pred_fallthru
          _
        %s326 = sand.u32 %s46, 1
        %s327 = scalar_lea.sflag [#allocation5], %s326
        %s328 = sand.u32 %s46, 1
        %s329 = smul.addr %s328, 8
        %s330 = scalar_lea.vmem [#allocation4], %s329
        %p331 = pneg %p59
        %p332 = pneg %p56
        %p333 = pneg %p80
        %p334 = pneg %p77
        %p335 = pneg %p101
        %p336 = pneg %p98
        %p337 = pneg %p122
        %p338 = pneg %p119
        %p339 = pneg %p143
        %p340 = pneg %p140
        %p341 = pneg %p164
        %p342 = pneg %p161
        %p343 = pneg %p185
        %p344 = pneg %p182
        %p345 = pneg %p213
        %p346 = pneg %p210
        %s347 = sand.u32 %s200, 1
        %s348 = scalar_lea.sflag [#allocation6], %s347
        %s349 = sand.u32 %s200, 1
        %s350 = smul.addr %s349, 8
        %s351 = scalar_lea.vmem [#allocation12], %s350
        %p352 = scmp.eq.s32.totalorder %s31, 0
        // Predicated region
        $region65: #{tpu_custom_call.1} parent=47 // pred_check
          %p353 = pneg %p352
        $region66: #{tpu_custom_call.1} parent=47 // pred_check_branch
          %355 = sbr.rel (%p353) target = $region68
        $region67: #{tpu_custom_call.1} parent=47 // pred_region
          %v356 = vld [vmem:[%s309] sm:$0xff]
          %v357 = vld [vmem:[#allocation9] sm:$0xff]
          %v358 = vld [vmem:[#allocation9 + $0x8] sm:$0xff]
          %v359 = vld [vmem:[#allocation9 + $0x10] sm:$0xff]
          %v360 = vld [vmem:[#allocation9 + $0x18] sm:$0xff]
          %v361 = vld [vmem:[%s4] sm:$0x1]
          %v363 = vlaneseq
          %v364 = vshrl.u32 %v363, 7
          %v365 = vsub.s32 0, %v364
          %v366 = vrot.slane %v361, %v365
          %vm368 = vcmask 261120
          %v370 = vsel %vm368, %v356, 0
          %372 = vmatprep.subr.mxu0 0.0
          %373 = vmatpush1.msra.mxu0 0.0
          %374 = vmatprep.subr.mxu0 0.0
          %375 = vmatpush1.msra.mxu0 0.0
          %376 = vmatprep.subr.mxu0 0.0
          %377 = vmatpush1.msra.mxu0 0.0
          %378 = vmatprep.subr.mxu0 0.0
          %379 = vmatpush1.msra.mxu0 0.0
          %380 = vmatprep.subr.mxu0 0.0
          %381 = vmatpush1.msra.mxu0 0.0
          %382 = vmatprep.subr.mxu0 0.0
          %383 = vmatpush1.msra.mxu0 0.0
          %384 = vmatprep.subr.mxu0 0.0
          %385 = vmatpush1.msra.mxu0 0.0
          %386 = vmatprep.subr.mxu0 0.0
          %387 = vmatpush1.msra.mxu0 0.0
          %388 = vmatprep.subr.mxu0 0.0
          %389 = vmatpush1.msra.mxu0 0.0
          %390 = vmatprep.subr.mxu0 0.0
          %391 = vmatpush1.msra.mxu0 0.0
          %392 = vmatprep.subr.mxu0 0.0
          %393 = vmatpush1.msra.mxu0 0.0
          %394 = vmatprep.subr.mxu0 0.0
          %395 = vmatpush1.msra.mxu0 0.0
          %396 = vmatprep.subr.mxu0 0.0
          %397 = vmatpush1.msra.mxu0 %v360
          %398 = vmatprep.subr.mxu0 0.0
          %399 = vmatpush1.msra.mxu0 %v359
          %400 = vmatprep.subr.mxu0 0.0
          %401 = vmatpush1.msra.mxu0 %v358
          %402 = vmatprep.subr.mxu0 0.0
          %403 = vmatpush1.msra.mxu0 %v357
          %404 = vmatprep.subr.mxu0 0.0
          %405 = vmatpush2.msra.mxu0 0.0
          %406 = vmatprep.subr.mxu0 0.0
          %407 = vmatpush2.msra.mxu0 0.0
          %408 = vmatprep.subr.mxu0 0.0
          %409 = vmatpush2.msra.mxu0 0.0
          %410 = vmatprep.subr.mxu0 0.0
          %411 = vmatpush2.msra.mxu0 0.0
          %412 = vmatprep.subr.mxu0 0.0
          %413 = vmatpush2.msra.mxu0 0.0
          %414 = vmatprep.subr.mxu0 0.0
          %415 = vmatpush2.msra.mxu0 0.0
          %416 = vmatprep.subr.mxu0 0.0
          %417 = vmatpush2.msra.mxu0 0.0
          %418 = vmatprep.subr.mxu0 0.0
          %419 = vmatpush2.msra.mxu0 0.0
          %420 = vmatprep.subr.mxu0 0.0
          %421 = vmatpush2.msra.mxu0 0.0
          %422 = vmatprep.subr.mxu0 0.0
          %423 = vmatpush2.msra.mxu0 0.0
          %424 = vmatprep.subr.mxu0 0.0
          %425 = vmatpush2.msra.mxu0 0.0
          %426 = vmatprep.subr.mxu0 0.0
          %427 = vmatpush2.msra.mxu0 0.0
          %428 = vmatprep.subr.mxu0 0.0
          %429 = vmatpush2.msra.mxu0 0.0
          %430 = vmatprep.subr.mxu0 0.0
          %431 = vmatpush2.msra.mxu0 0.0
          %432 = vmatprep.subr.mxu0 0.0
          %433 = vmatpush2.msra.mxu0 0.0
          %434 = vmatprep.subr.mxu0 0.0
          %435 = vmatpush2.msra.mxu0 0.0
          %436 = vmatprep.mubr.f32.mxu0 0.0
          %437 = vmatmul.mubr.f32.gmra.mxu0 %v370
          %v438 = vpop.f32.mrf.mxu0
          %v439 = vadd.f32 %v366, %v438
          %v440 = vpop.f32.mrf.mxu0
          %441 = vdwg.mxu0
          %vm442 = vcmask 523264
          %443 = vst.msk [vmem:[#allocation2] sm:$0xff] %vm442, %v439
        $region68: #{tpu_custom_call.1} parent=47 // pred_fallthru
          _
        %s444 = smul.u32 %s31, 8
        %s445 = scalar_lea.vmem %s309, %s444 [#allocation4]
        %v446 = vld [vmem:[%s445] sm:$0xff]
        %v447 = vld [vmem:[#allocation7] sm:$0xff]
        %v448 = vld [vmem:[#allocation7 + $0x8] sm:$0xff]
        %v449 = vld [vmem:[#allocation7 + $0x10] sm:$0xff]
        %v450 = vld [vmem:[#allocation7 + $0x18] sm:$0xff]
        %v451 = vld [vmem:[%s2] sm:$0x1]
        %v453 = vlaneseq
        %v454 = vshrl.u32 %v453, 7
        %v455 = vsub.s32 0, %v454
        %v456 = vrot.slane %v451, %v455
        %vm458 = vcmask 261120
        %v460 = vsel %vm458, %v446, 0
        %462 = vmatprep.subr.mxu0 0.0
        %463 = vmatpush1.msra.mxu0 0.0
        %464 = vmatprep.subr.mxu0 0.0
        %465 = vmatpush1.msra.mxu0 0.0
        %466 = vmatprep.subr.mxu0 0.0
        %467 = vmatpush1.msra.mxu0 0.0
        %468 = vmatprep.subr.mxu0 0.0
        %469 = vmatpush1.msra.mxu0 0.0
        %470 = vmatprep.subr.mxu0 0.0
        %471 = vmatpush1.msra.mxu0 0.0
        %472 = vmatprep.subr.mxu0 0.0
        %473 = vmatpush1.msra.mxu0 0.0
        %474 = vmatprep.subr.mxu0 0.0
        %475 = vmatpush1.msra.mxu0 0.0
        %476 = vmatprep.subr.mxu0 0.0
        %477 = vmatpush1.msra.mxu0 0.0
        %478 = vmatprep.subr.mxu0 0.0
        %479 = vmatpush1.msra.mxu0 0.0
        %480 = vmatprep.subr.mxu0 0.0
        %481 = vmatpush1.msra.mxu0 0.0
        %482 = vmatprep.subr.mxu0 0.0
        %483 = vmatpush1.msra.mxu0 0.0
        %484 = vmatprep.subr.mxu0 0.0
        %485 = vmatpush1.msra.mxu0 0.0
        %486 = vmatprep.subr.mxu0 0.0
        %487 = vmatpush1.msra.mxu0 %v450
        %488 = vmatprep.subr.mxu0 0.0
        %489 = vmatpush1.msra.mxu0 %v449
        %490 = vmatprep.subr.mxu0 0.0
        %491 = vmatpush1.msra.mxu0 %v448
        %492 = vmatprep.subr.mxu0 0.0
        %493 = vmatpush1.msra.mxu0 %v447
        %494 = vmatprep.subr.mxu0 0.0
        %495 = vmatpush2.msra.mxu0 0.0
        %496 = vmatprep.subr.mxu0 0.0
        %497 = vmatpush2.msra.mxu0 0.0
        %498 = vmatprep.subr.mxu0 0.0
        %499 = vmatpush2.msra.mxu0 0.0
        %500 = vmatprep.subr.mxu0 0.0
        %501 = vmatpush2.msra.mxu0 0.0
        %502 = vmatprep.subr.mxu0 0.0
        %503 = vmatpush2.msra.mxu0 0.0
        %504 = vmatprep.subr.mxu0 0.0
        %505 = vmatpush2.msra.mxu0 0.0
        %506 = vmatprep.subr.mxu0 0.0
        %507 = vmatpush2.msra.mxu0 0.0
        %508 = vmatprep.subr.mxu0 0.0
        %509 = vmatpush2.msra.mxu0 0.0
        %510 = vmatprep.subr.mxu0 0.0
        %511 = vmatpush2.msra.mxu0 0.0
        %512 = vmatprep.subr.mxu0 0.0
        %513 = vmatpush2.msra.mxu0 0.0
        %514 = vmatprep.subr.mxu0 0.0
        %515 = vmatpush2.msra.mxu0 0.0
        %516 = vmatprep.subr.mxu0 0.0
        %517 = vmatpush2.msra.mxu0 0.0
        %518 = vmatprep.subr.mxu0 0.0
        %519 = vmatpush2.msra.mxu0 0.0
        %520 = vmatprep.subr.mxu0 0.0
        %521 = vmatpush2.msra.mxu0 0.0
        %522 = vmatprep.subr.mxu0 0.0
        %523 = vmatpush2.msra.mxu0 0.0
        %524 = vmatprep.subr.mxu0 0.0
        %525 = vmatpush2.msra.mxu0 0.0
        %526 = vmatprep.mubr.f32.mxu0 0.0
        %527 = vmatmul.mubr.f32.gmra.mxu0 %v460
        %v528 = vpop.f32.mrf.mxu0
        %v529 = vadd.f32 %v456, %v528
        %v530 = vpop.f32.mrf.mxu0
        %531 = vdwg.mxu0
        %v532 = vmul.f32 %v529, 0.17677669
        %v533 = vlaneseq
        %v534 = vshrl.u32 %v533, 7
        %v535 = vlaneseq
        %v536 = vand.u32 %v535, 127
        %vm537 = vcmp.ge.s32.totalorder %v534, %v536
        %s538 = sadd.s32 %s31, 1
        // While loop
        $region69: #{tpu_custom_call.1} parent=47 // loop_pre_header
          _
        $region70: #{tpu_custom_call.1} parent=47 // loop_header
          %s540 = sphi 0, %s542
          %p541 = scmp.ge.s32.totalorder %s540, %s538
          %v545 = vphi -1e+30, %v637
          %v546 = vphi 0.0, %v648
          %v547 = vphi 0.0, %v726
        $region71: #{tpu_custom_call.1} parent=47 // loop_header_branch
          %544 = sbr.rel (%p541) target = $region75
        $region72: #{tpu_custom_call.1} parent=47 // loop_body
          %s548 = smul.u32 %s540, 8
          %s549 = scalar_lea.vmem [#allocation2], %s548
          %v550 = vld [vmem:[%s549] sm:$0xff]
          %vm551 = vcmask 64512
          %v553 = vsel %vm551, %v532, 0
          %v556 = vsel %vm551, %v550, 0
          %558 = vmatprep.subr.mxu0 0.0
          %559 = vmatpush1.xpose.msra.mxu0 0.0
          %560 = vmatprep.subr.mxu0 0.0
          %561 = vmatpush1.xpose.msra.mxu0 0.0
          %562 = vmatprep.subr.mxu0 0.0
          %563 = vmatpush1.xpose.msra.mxu0 0.0
          %564 = vmatprep.subr.mxu0 0.0
          %565 = vmatpush1.xpose.msra.mxu0 0.0
          %566 = vmatprep.subr.mxu0 0.0
          %567 = vmatpush1.xpose.msra.mxu0 0.0
          %568 = vmatprep.subr.mxu0 0.0
          %569 = vmatpush1.xpose.msra.mxu0 0.0
          %570 = vmatprep.subr.mxu0 0.0
          %571 = vmatpush1.xpose.msra.mxu0 0.0
          %572 = vmatprep.subr.mxu0 0.0
          %573 = vmatpush1.xpose.msra.mxu0 0.0
          %574 = vmatprep.subr.mxu0 0.0
          %575 = vmatpush1.xpose.msra.mxu0 0.0
          %576 = vmatprep.subr.mxu0 0.0
          %577 = vmatpush1.xpose.msra.mxu0 0.0
          %578 = vmatprep.subr.mxu0 0.0
          %579 = vmatpush1.xpose.msra.mxu0 0.0
          %580 = vmatprep.subr.mxu0 0.0
          %581 = vmatpush1.xpose.msra.mxu0 0.0
          %582 = vmatprep.subr.mxu0 0.0
          %583 = vmatpush1.xpose.msra.mxu0 0.0
          %584 = vmatprep.subr.mxu0 0.0
          %585 = vmatpush1.xpose.msra.mxu0 0.0
          %586 = vmatprep.subr.mxu0 0.0
          %587 = vmatpush1.xpose.msra.mxu0 0.0
          %588 = vmatprep.subr.mxu0 0.0
          %589 = vmatpush1.xpose.msra.mxu0 %v556
          %590 = vmatprep.subr.mxu0 0.0
          %591 = vmatpush2.xpose.msra.mxu0 0.0
          %592 = vmatprep.subr.mxu0 0.0
          %593 = vmatpush2.xpose.msra.mxu0 0.0
          %594 = vmatprep.subr.mxu0 0.0
          %595 = vmatpush2.xpose.msra.mxu0 0.0
          %596 = vmatprep.subr.mxu0 0.0
          %597 = vmatpush2.xpose.msra.mxu0 0.0
          %598 = vmatprep.subr.mxu0 0.0
          %599 = vmatpush2.xpose.msra.mxu0 0.0
          %600 = vmatprep.subr.mxu0 0.0
          %601 = vmatpush2.xpose.msra.mxu0 0.0
          %602 = vmatprep.subr.mxu0 0.0
          %603 = vmatpush2.xpose.msra.mxu0 0.0
          %604 = vmatprep.subr.mxu0 0.0
          %605 = vmatpush2.xpose.msra.mxu0 0.0
          %606 = vmatprep.subr.mxu0 0.0
          %607 = vmatpush2.xpose.msra.mxu0 0.0
          %608 = vmatprep.subr.mxu0 0.0
          %609 = vmatpush2.xpose.msra.mxu0 0.0
          %610 = vmatprep.subr.mxu0 0.0
          %611 = vmatpush2.xpose.msra.mxu0 0.0
          %612 = vmatprep.subr.mxu0 0.0
          %613 = vmatpush2.xpose.msra.mxu0 0.0
          %614 = vmatprep.subr.mxu0 0.0
          %615 = vmatpush2.xpose.msra.mxu0 0.0
          %616 = vmatprep.subr.mxu0 0.0
          %617 = vmatpush2.xpose.msra.mxu0 0.0
          %618 = vmatprep.subr.mxu0 0.0
          %619 = vmatpush2.xpose.msra.mxu0 0.0
          %620 = vmatprep.subr.mxu0 0.0
          %621 = vmatpush2.xpose.msra.mxu0 0.0
          %622 = vmatprep.mubr.f32.mxu0 0.0
          %623 = vmatmul.mubr.f32.gmra.mxu0 %v553
          %v624 = vpop.f32.mrf.mxu0
          %v625 = vadd.f32 0.0, %v624
          %v626 = vpop.f32.mrf.mxu0
          %627 = vdwg.mxu0
          %p628 = scmp.lt.s32.totalorder %s540, %s31
          %s629 = scalar_select %p628, 1, 0
          %v630 = vstv %s629
          %vm631 = vcmp.eq.s32.totalorder %v630, 1
          %vm632 = vmor %vm631, %vm537
          %v633 = vsel %vm632, %v625, -1e+30
          %v634 = vsel %vm551, %v633, -inf
          %635 = vmax.xlane.f32.xlu0 %v634
          %v636 = vpop.xlane.xlu0 %635
          %v637 = vmax.f32 %v545, %v636
          %v638 = vsub.f32 %v545, %v637
          %v639 = vmul.f32 %v638, 1.442695
          %v640 = vpow.pop %v639
          %v641 = vsub.f32 %v633, %v637
          %v642 = vmul.f32 %v641, 1.442695
          %v643 = vpow.pop %v642
          %v644 = vmul.f32 %v640, %v546
          %v645 = vsel %vm551, %v643, 0.0
          %646 = vadd.xlane.f32.xlu0 %v645
          %v647 = vpop.xlane.xlu0 %646
          %v648 = vadd.f32 %v644, %v647
          %v649 = vmul.f32 %v640, %v547
          %650 = vrot.lane.b32.xlu0 %v550, 96
          %v651 = vpop.permute.xlu0 %650
          %v654 = vsel %vm551, %v643, 0
          %656 = vmatprep.subr.mxu0 0.0
          %657 = vmatpush1.msra.mxu0 0.0
          %658 = vmatprep.subr.mxu0 0.0
          %659 = vmatpush1.msra.mxu0 0.0
          %660 = vmatprep.subr.mxu0 0.0
          %661 = vmatpush1.msra.mxu0 0.0
          %662 = vmatprep.subr.mxu0 0.0
          %663 = vmatpush1.msra.mxu0 0.0
          %664 = vmatprep.subr.mxu0 0.0
          %665 = vmatpush1.msra.mxu0 0.0
          %666 = vmatprep.subr.mxu0 0.0
          %667 = vmatpush1.msra.mxu0 0.0
          %668 = vmatprep.subr.mxu0 0.0
          %669 = vmatpush1.msra.mxu0 0.0
          %670 = vmatprep.subr.mxu0 0.0
          %671 = vmatpush1.msra.mxu0 0.0
          %672 = vmatprep.subr.mxu0 0.0
          %673 = vmatpush1.msra.mxu0 0.0
          %674 = vmatprep.subr.mxu0 0.0
          %675 = vmatpush1.msra.mxu0 0.0
          %676 = vmatprep.subr.mxu0 0.0
          %677 = vmatpush1.msra.mxu0 0.0
          %678 = vmatprep.subr.mxu0 0.0
          %679 = vmatpush1.msra.mxu0 0.0
          %680 = vmatprep.subr.mxu0 0.0
          %681 = vmatpush1.msra.mxu0 0.0
          %682 = vmatprep.subr.mxu0 0.0
          %683 = vmatpush1.msra.mxu0 0.0
          %684 = vmatprep.subr.mxu0 0.0
          %685 = vmatpush1.msra.mxu0 0.0
          %686 = vmatprep.subr.mxu0 0.0
          %687 = vmatpush1.msra.mxu0 %v651
          %688 = vmatprep.subr.mxu0 0.0
          %689 = vmatpush2.msra.mxu0 0.0
          %690 = vmatprep.subr.mxu0 0.0
          %691 = vmatpush2.msra.mxu0 0.0
          %692 = vmatprep.subr.mxu0 0.0
          %693 = vmatpush2.msra.mxu0 0.0
          %694 = vmatprep.subr.mxu0 0.0
          %695 = vmatpush2.msra.mxu0 0.0
          %696 = vmatprep.subr.mxu0 0.0
          %697 = vmatpush2.msra.mxu0 0.0
          %698 = vmatprep.subr.mxu0 0.0
          %699 = vmatpush2.msra.mxu0 0.0
          %700 = vmatprep.subr.mxu0 0.0
          %701 = vmatpush2.msra.mxu0 0.0
          %702 = vmatprep.subr.mxu0 0.0
          %703 = vmatpush2.msra.mxu0 0.0
          %704 = vmatprep.subr.mxu0 0.0
          %705 = vmatpush2.msra.mxu0 0.0
          %706 = vmatprep.subr.mxu0 0.0
          %707 = vmatpush2.msra.mxu0 0.0
          %708 = vmatprep.subr.mxu0 0.0
          %709 = vmatpush2.msra.mxu0 0.0
          %710 = vmatprep.subr.mxu0 0.0
          %711 = vmatpush2.msra.mxu0 0.0
          %712 = vmatprep.subr.mxu0 0.0
          %713 = vmatpush2.msra.mxu0 0.0
          %714 = vmatprep.subr.mxu0 0.0
          %715 = vmatpush2.msra.mxu0 0.0
          %716 = vmatprep.subr.mxu0 0.0
          %717 = vmatpush2.msra.mxu0 0.0
          %718 = vmatprep.subr.mxu0 0.0
          %719 = vmatpush2.msra.mxu0 0.0
          %720 = vmatprep.mubr.f32.mxu0 0.0
          %721 = vmatmul.mubr.f32.gmra.mxu0 %v654
          %v722 = vpop.f32.mrf.mxu0
          %v723 = vadd.f32 0.0, %v722
          %v724 = vpop.f32.mrf.mxu0
          %725 = vdwg.mxu0
          %v726 = vadd.f32 %v649, %v723
        $region73: #{tpu_custom_call.1} parent=47 // loop_footer
          %s542 = sadd.s32 %s540, 1
        $region74: #{tpu_custom_call.1} parent=47 // loop_footer_branch
          %539 = sbr.rel target = $region70
        $region75: #{tpu_custom_call.1} parent=47 // loop_exit
          _
        %v727 = vrcp.pop %v546
        %v728 = vmul.f32 %v547, %v727
        %vm729 = vcmask 64512
        %730 = vst.msk [vmem:[#allocation3] sm:$0xff] %vm729, %v728
        // While loop
        $region76: #{tpu_custom_call.1} parent=47 // loop_pre_header
          _
        $region77: #{tpu_custom_call.1} parent=47 // loop_header
          %s732 = sphi 0, %s734
          %p733 = scmp.ge.s32.totalorder %s732, %s538
          %v737 = vphi -1e+30, %v832
          %v738 = vphi 0.0, %v843
          %v739 = vphi 0.0, %v921
        $region78: #{tpu_custom_call.1} parent=47 // loop_header_branch
          %736 = sbr.rel (%p733) target = $region82
        $region79: #{tpu_custom_call.1} parent=47 // loop_body
          %s740 = smul.u32 %s732, 8
          %s741 = scalar_lea.vmem [#allocation2], %s740
          %v742 = vld [vmem:[%s741] sm:$0xff]
          %744 = vrot.lane.b32.xlu0 %v532, 120
          %v745 = vpop.permute.xlu0 %744
          %747 = vrot.lane.b32.xlu0 %v742, 120
          %v748 = vpop.permute.xlu0 %747
          %v749 = vsel %vm729, %v745, 0
          %v751 = vsel %vm729, %v748, 0
          %753 = vmatprep.subr.mxu0 0.0
          %754 = vmatpush1.xpose.msra.mxu0 0.0
          %755 = vmatprep.subr.mxu0 0.0
          %756 = vmatpush1.xpose.msra.mxu0 0.0
          %757 = vmatprep.subr.mxu0 0.0
          %758 = vmatpush1.xpose.msra.mxu0 0.0
          %759 = vmatprep.subr.mxu0 0.0
          %760 = vmatpush1.xpose.msra.mxu0 0.0
          %761 = vmatprep.subr.mxu0 0.0
          %762 = vmatpush1.xpose.msra.mxu0 0.0
          %763 = vmatprep.subr.mxu0 0.0
          %764 = vmatpush1.xpose.msra.mxu0 0.0
          %765 = vmatprep.subr.mxu0 0.0
          %766 = vmatpush1.xpose.msra.mxu0 0.0
          %767 = vmatprep.subr.mxu0 0.0
          %768 = vmatpush1.xpose.msra.mxu0 0.0
          %769 = vmatprep.subr.mxu0 0.0
          %770 = vmatpush1.xpose.msra.mxu0 0.0
          %771 = vmatprep.subr.mxu0 0.0
          %772 = vmatpush1.xpose.msra.mxu0 0.0
          %773 = vmatprep.subr.mxu0 0.0
          %774 = vmatpush1.xpose.msra.mxu0 0.0
          %775 = vmatprep.subr.mxu0 0.0
          %776 = vmatpush1.xpose.msra.mxu0 0.0
          %777 = vmatprep.subr.mxu0 0.0
          %778 = vmatpush1.xpose.msra.mxu0 0.0
          %779 = vmatprep.subr.mxu0 0.0
          %780 = vmatpush1.xpose.msra.mxu0 0.0
          %781 = vmatprep.subr.mxu0 0.0
          %782 = vmatpush1.xpose.msra.mxu0 0.0
          %783 = vmatprep.subr.mxu0 0.0
          %784 = vmatpush1.xpose.msra.mxu0 %v751
          %785 = vmatprep.subr.mxu0 0.0
          %786 = vmatpush2.xpose.msra.mxu0 0.0
          %787 = vmatprep.subr.mxu0 0.0
          %788 = vmatpush2.xpose.msra.mxu0 0.0
          %789 = vmatprep.subr.mxu0 0.0
          %790 = vmatpush2.xpose.msra.mxu0 0.0
          %791 = vmatprep.subr.mxu0 0.0
          %792 = vmatpush2.xpose.msra.mxu0 0.0
          %793 = vmatprep.subr.mxu0 0.0
          %794 = vmatpush2.xpose.msra.mxu0 0.0
          %795 = vmatprep.subr.mxu0 0.0
          %796 = vmatpush2.xpose.msra.mxu0 0.0
          %797 = vmatprep.subr.mxu0 0.0
          %798 = vmatpush2.xpose.msra.mxu0 0.0
          %799 = vmatprep.subr.mxu0 0.0
          %800 = vmatpush2.xpose.msra.mxu0 0.0
          %801 = vmatprep.subr.mxu0 0.0
          %802 = vmatpush2.xpose.msra.mxu0 0.0
          %803 = vmatprep.subr.mxu0 0.0
          %804 = vmatpush2.xpose.msra.mxu0 0.0
          %805 = vmatprep.subr.mxu0 0.0
          %806 = vmatpush2.xpose.msra.mxu0 0.0
          %807 = vmatprep.subr.mxu0 0.0
          %808 = vmatpush2.xpose.msra.mxu0 0.0
          %809 = vmatprep.subr.mxu0 0.0
          %810 = vmatpush2.xpose.msra.mxu0 0.0
          %811 = vmatprep.subr.mxu0 0.0
          %812 = vmatpush2.xpose.msra.mxu0 0.0
          %813 = vmatprep.subr.mxu0 0.0
          %814 = vmatpush2.xpose.msra.mxu0 0.0
          %815 = vmatprep.subr.mxu0 0.0
          %816 = vmatpush2.xpose.msra.mxu0 0.0
          %817 = vmatprep.mubr.f32.mxu0 0.0
          %818 = vmatmul.mubr.f32.gmra.mxu0 %v749
          %v819 = vpop.f32.mrf.mxu0
          %v820 = vadd.f32 0.0, %v819
          %v821 = vpop.f32.mrf.mxu0
          %822 = vdwg.mxu0
          %p823 = scmp.lt.s32.totalorder %s732, %s31
          %s824 = scalar_select %p823, 1, 0
          %v825 = vstv %s824
          %vm826 = vcmp.eq.s32.totalorder %v825, 1
          %vm827 = vmor %vm826, %vm537
          %v828 = vsel %vm827, %v820, -1e+30
          %v829 = vsel %vm729, %v828, -inf
          %830 = vmax.xlane.f32.xlu0 %v829
          %v831 = vpop.xlane.xlu0 %830
          %v832 = vmax.f32 %v737, %v831
          %v833 = vsub.f32 %v737, %v832
          %v834 = vmul.f32 %v833, 1.442695
          %v835 = vpow.pop %v834
          %v836 = vsub.f32 %v828, %v832
          %v837 = vmul.f32 %v836, 1.442695
          %v838 = vpow.pop %v837
          %v839 = vmul.f32 %v835, %v738
          %v840 = vsel %vm729, %v838, 0.0
          %841 = vadd.xlane.f32.xlu0 %v840
          %v842 = vpop.xlane.xlu0 %841
          %v843 = vadd.f32 %v839, %v842
          %v844 = vmul.f32 %v835, %v739
          %845 = vrot.lane.b32.xlu0 %v742, 88
          %v846 = vpop.permute.xlu0 %845
          %v849 = vsel %vm729, %v838, 0
          %851 = vmatprep.subr.mxu0 0.0
          %852 = vmatpush1.msra.mxu0 0.0
          %853 = vmatprep.subr.mxu0 0.0
          %854 = vmatpush1.msra.mxu0 0.0
          %855 = vmatprep.subr.mxu0 0.0
          %856 = vmatpush1.msra.mxu0 0.0
          %857 = vmatprep.subr.mxu0 0.0
          %858 = vmatpush1.msra.mxu0 0.0
          %859 = vmatprep.subr.mxu0 0.0
          %860 = vmatpush1.msra.mxu0 0.0
          %861 = vmatprep.subr.mxu0 0.0
          %862 = vmatpush1.msra.mxu0 0.0
          %863 = vmatprep.subr.mxu0 0.0
          %864 = vmatpush1.msra.mxu0 0.0
          %865 = vmatprep.subr.mxu0 0.0
          %866 = vmatpush1.msra.mxu0 0.0
          %867 = vmatprep.subr.mxu0 0.0
          %868 = vmatpush1.msra.mxu0 0.0
          %869 = vmatprep.subr.mxu0 0.0
          %870 = vmatpush1.msra.mxu0 0.0
          %871 = vmatprep.subr.mxu0 0.0
          %872 = vmatpush1.msra.mxu0 0.0
          %873 = vmatprep.subr.mxu0 0.0
          %874 = vmatpush1.msra.mxu0 0.0
          %875 = vmatprep.subr.mxu0 0.0
          %876 = vmatpush1.msra.mxu0 0.0
          %877 = vmatprep.subr.mxu0 0.0
          %878 = vmatpush1.msra.mxu0 0.0
          %879 = vmatprep.subr.mxu0 0.0
          %880 = vmatpush1.msra.mxu0 0.0
          %881 = vmatprep.subr.mxu0 0.0
          %882 = vmatpush1.msra.mxu0 %v846
          %883 = vmatprep.subr.mxu0 0.0
          %884 = vmatpush2.msra.mxu0 0.0
          %885 = vmatprep.subr.mxu0 0.0
          %886 = vmatpush2.msra.mxu0 0.0
          %887 = vmatprep.subr.mxu0 0.0
          %888 = vmatpush2.msra.mxu0 0.0
          %889 = vmatprep.subr.mxu0 0.0
          %890 = vmatpush2.msra.mxu0 0.0
          %891 = vmatprep.subr.mxu0 0.0
          %892 = vmatpush2.msra.mxu0 0.0
          %893 = vmatprep.subr.mxu0 0.0
          %894 = vmatpush2.msra.mxu0 0.0
          %895 = vmatprep.subr.mxu0 0.0
          %896 = vmatpush2.msra.mxu0 0.0
          %897 = vmatprep.subr.mxu0 0.0
          %898 = vmatpush2.msra.mxu0 0.0
          %899 = vmatprep.subr.mxu0 0.0
          %900 = vmatpush2.msra.mxu0 0.0
          %901 = vmatprep.subr.mxu0 0.0
          %902 = vmatpush2.msra.mxu0 0.0
          %903 = vmatprep.subr.mxu0 0.0
          %904 = vmatpush2.msra.mxu0 0.0
          %905 = vmatprep.subr.mxu0 0.0
          %906 = vmatpush2.msra.mxu0 0.0
          %907 = vmatprep.subr.mxu0 0.0
          %908 = vmatpush2.msra.mxu0 0.0
          %909 = vmatprep.subr.mxu0 0.0
          %910 = vmatpush2.msra.mxu0 0.0
          %911 = vmatprep.subr.mxu0 0.0
          %912 = vmatpush2.msra.mxu0 0.0
          %913 = vmatprep.subr.mxu0 0.0
          %914 = vmatpush2.msra.mxu0 0.0
          %915 = vmatprep.mubr.f32.mxu0 0.0
          %916 = vmatmul.mubr.f32.gmra.mxu0 %v849
          %v917 = vpop.f32.mrf.mxu0
          %v918 = vadd.f32 0.0, %v917
          %v919 = vpop.f32.mrf.mxu0
          %920 = vdwg.mxu0
          %v921 = vadd.f32 %v844, %v918
        $region80: #{tpu_custom_call.1} parent=47 // loop_footer
          %s734 = sadd.s32 %s732, 1
        $region81: #{tpu_custom_call.1} parent=47 // loop_footer_branch
          %731 = sbr.rel target = $region77
        $region82: #{tpu_custom_call.1} parent=47 // loop_exit
          _
        %v922 = vrcp.pop %v738
        %v923 = vmul.f32 %v739, %v922
        %925 = vrot.lane.b32.xlu0 %v923, 8
        %v926 = vpop.permute.xlu0 %925
        %vm928 = vcmask 130112
        %929 = vst.msk [vmem:[#allocation3] sm:$0xff] %vm928, %v926
        // While loop
        $region83: #{tpu_custom_call.1} parent=47 // loop_pre_header
          _
        $region84: #{tpu_custom_call.1} parent=47 // loop_header
          %s931 = sphi 0, %s933
          %p932 = scmp.ge.s32.totalorder %s931, %s538
          %v936 = vphi -1e+30, %v1031
          %v937 = vphi 0.0, %v1042
          %v938 = vphi 0.0, %v1120
        $region85: #{tpu_custom_call.1} parent=47 // loop_header_branch
          %935 = sbr.rel (%p932) target = $region89
        $region86: #{tpu_custom_call.1} parent=47 // loop_body
          %s939 = smul.u32 %s931, 8
          %s940 = scalar_lea.vmem [#allocation2], %s939
          %v941 = vld [vmem:[%s940] sm:$0xff]
          %943 = vrot.lane.b32.xlu0 %v532, 112
          %v944 = vpop.permute.xlu0 %943
          %946 = vrot.lane.b32.xlu0 %v941, 112
          %v947 = vpop.permute.xlu0 %946
          %v948 = vsel %vm729, %v944, 0
          %v950 = vsel %vm729, %v947, 0
          %952 = vmatprep.subr.mxu0 0.0
          %953 = vmatpush1.xpose.msra.mxu0 0.0
          %954 = vmatprep.subr.mxu0 0.0
          %955 = vmatpush1.xpose.msra.mxu0 0.0
          %956 = vmatprep.subr.mxu0 0.0
          %957 = vmatpush1.xpose.msra.mxu0 0.0
          %958 = vmatprep.subr.mxu0 0.0
          %959 = vmatpush1.xpose.msra.mxu0 0.0
          %960 = vmatprep.subr.mxu0 0.0
          %961 = vmatpush1.xpose.msra.mxu0 0.0
          %962 = vmatprep.subr.mxu0 0.0
          %963 = vmatpush1.xpose.msra.mxu0 0.0
          %964 = vmatprep.subr.mxu0 0.0
          %965 = vmatpush1.xpose.msra.mxu0 0.0
          %966 = vmatprep.subr.mxu0 0.0
          %967 = vmatpush1.xpose.msra.mxu0 0.0
          %968 = vmatprep.subr.mxu0 0.0
          %969 = vmatpush1.xpose.msra.mxu0 0.0
          %970 = vmatprep.subr.mxu0 0.0
          %971 = vmatpush1.xpose.msra.mxu0 0.0
          %972 = vmatprep.subr.mxu0 0.0
          %973 = vmatpush1.xpose.msra.mxu0 0.0
          %974 = vmatprep.subr.mxu0 0.0
          %975 = vmatpush1.xpose.msra.mxu0 0.0
          %976 = vmatprep.subr.mxu0 0.0
          %977 = vmatpush1.xpose.msra.mxu0 0.0
          %978 = vmatprep.subr.mxu0 0.0
          %979 = vmatpush1.xpose.msra.mxu0 0.0
          %980 = vmatprep.subr.mxu0 0.0
          %981 = vmatpush1.xpose.msra.mxu0 0.0
          %982 = vmatprep.subr.mxu0 0.0
          %983 = vmatpush1.xpose.msra.mxu0 %v950
          %984 = vmatprep.subr.mxu0 0.0
          %985 = vmatpush2.xpose.msra.mxu0 0.0
          %986 = vmatprep.subr.mxu0 0.0
          %987 = vmatpush2.xpose.msra.mxu0 0.0
          %988 = vmatprep.subr.mxu0 0.0
          %989 = vmatpush2.xpose.msra.mxu0 0.0
          %990 = vmatprep.subr.mxu0 0.0
          %991 = vmatpush2.xpose.msra.mxu0 0.0
          %992 = vmatprep.subr.mxu0 0.0
          %993 = vmatpush2.xpose.msra.mxu0 0.0
          %994 = vmatprep.subr.mxu0 0.0
          %995 = vmatpush2.xpose.msra.mxu0 0.0
          %996 = vmatprep.subr.mxu0 0.0
          %997 = vmatpush2.xpose.msra.mxu0 0.0
          %998 = vmatprep.subr.mxu0 0.0
          %999 = vmatpush2.xpose.msra.mxu0 0.0
          %1000 = vmatprep.subr.mxu0 0.0
          %1001 = vmatpush2.xpose.msra.mxu0 0.0
          %1002 = vmatprep.subr.mxu0 0.0
          %1003 = vmatpush2.xpose.msra.mxu0 0.0
          %1004 = vmatprep.subr.mxu0 0.0
          %1005 = vmatpush2.xpose.msra.mxu0 0.0
          %1006 = vmatprep.subr.mxu0 0.0
          %1007 = vmatpush2.xpose.msra.mxu0 0.0
          %1008 = vmatprep.subr.mxu0 0.0
          %1009 = vmatpush2.xpose.msra.mxu0 0.0
          %1010 = vmatprep.subr.mxu0 0.0
          %1011 = vmatpush2.xpose.msra.mxu0 0.0
          %1012 = vmatprep.subr.mxu0 0.0
          %1013 = vmatpush2.xpose.msra.mxu0 0.0
          %1014 = vmatprep.subr.mxu0 0.0
          %1015 = vmatpush2.xpose.msra.mxu0 0.0
          %1016 = vmatprep.mubr.f32.mxu0 0.0
          %1017 = vmatmul.mubr.f32.gmra.mxu0 %v948
          %v1018 = vpop.f32.mrf.mxu0
          %v1019 = vadd.f32 0.0, %v1018
          %v1020 = vpop.f32.mrf.mxu0
          %1021 = vdwg.mxu0
          %p1022 = scmp.lt.s32.totalorder %s931, %s31
          %s1023 = scalar_select %p1022, 1, 0
          %v1024 = vstv %s1023
          %vm1025 = vcmp.eq.s32.totalorder %v1024, 1
          %vm1026 = vmor %vm1025, %vm537
          %v1027 = vsel %vm1026, %v1019, -1e+30
          %v1028 = vsel %vm729, %v1027, -inf
          %1029 = vmax.xlane.f32.xlu0 %v1028
          %v1030 = vpop.xlane.xlu0 %1029
          %v1031 = vmax.f32 %v936, %v1030
          %v1032 = vsub.f32 %v936, %v1031
          %v1033 = vmul.f32 %v1032, 1.442695
          %v1034 = vpow.pop %v1033
          %v1035 = vsub.f32 %v1027, %v1031
          %v1036 = vmul.f32 %v1035, 1.442695
          %v1037 = vpow.pop %v1036
          %v1038 = vmul.f32 %v1034, %v937
          %v1039 = vsel %vm729, %v1037, 0.0
          %1040 = vadd.xlane.f32.xlu0 %v1039
          %v1041 = vpop.xlane.xlu0 %1040
          %v1042 = vadd.f32 %v1038, %v1041
          %v1043 = vmul.f32 %v1034, %v938
          %1044 = vrot.lane.b32.xlu0 %v941, 80
          %v1045 = vpop.permute.xlu0 %1044
          %v1048 = vsel %vm729, %v1037, 0
          %1050 = vmatprep.subr.mxu0 0.0
          %1051 = vmatpush1.msra.mxu0 0.0
          %1052 = vmatprep.subr.mxu0 0.0
          %1053 = vmatpush1.msra.mxu0 0.0
          %1054 = vmatprep.subr.mxu0 0.0
          %1055 = vmatpush1.msra.mxu0 0.0
          %1056 = vmatprep.subr.mxu0 0.0
          %1057 = vmatpush1.msra.mxu0 0.0
          %1058 = vmatprep.subr.mxu0 0.0
          %1059 = vmatpush1.msra.mxu0 0.0
          %1060 = vmatprep.subr.mxu0 0.0
          %1061 = vmatpush1.msra.mxu0 0.0
          %1062 = vmatprep.subr.mxu0 0.0
          %1063 = vmatpush1.msra.mxu0 0.0
          %1064 = vmatprep.subr.mxu0 0.0
          %1065 = vmatpush1.msra.mxu0 0.0
          %1066 = vmatprep.subr.mxu0 0.0
          %1067 = vmatpush1.msra.mxu0 0.0
          %1068 = vmatprep.subr.mxu0 0.0
          %1069 = vmatpush1.msra.mxu0 0.0
          %1070 = vmatprep.subr.mxu0 0.0
          %1071 = vmatpush1.msra.mxu0 0.0
          %1072 = vmatprep.subr.mxu0 0.0
          %1073 = vmatpush1.msra.mxu0 0.0
          %1074 = vmatprep.subr.mxu0 0.0
          %1075 = vmatpush1.msra.mxu0 0.0
          %1076 = vmatprep.subr.mxu0 0.0
          %1077 = vmatpush1.msra.mxu0 0.0
          %1078 = vmatprep.subr.mxu0 0.0
          %1079 = vmatpush1.msra.mxu0 0.0
          %1080 = vmatprep.subr.mxu0 0.0
          %1081 = vmatpush1.msra.mxu0 %v1045
          %1082 = vmatprep.subr.mxu0 0.0
          %1083 = vmatpush2.msra.mxu0 0.0
          %1084 = vmatprep.subr.mxu0 0.0
          %1085 = vmatpush2.msra.mxu0 0.0
          %1086 = vmatprep.subr.mxu0 0.0
          %1087 = vmatpush2.msra.mxu0 0.0
          %1088 = vmatprep.subr.mxu0 0.0
          %1089 = vmatpush2.msra.mxu0 0.0
          %1090 = vmatprep.subr.mxu0 0.0
          %1091 = vmatpush2.msra.mxu0 0.0
          %1092 = vmatprep.subr.mxu0 0.0
          %1093 = vmatpush2.msra.mxu0 0.0
          %1094 = vmatprep.subr.mxu0 0.0
          %1095 = vmatpush2.msra.mxu0 0.0
          %1096 = vmatprep.subr.mxu0 0.0
          %1097 = vmatpush2.msra.mxu0 0.0
          %1098 = vmatprep.subr.mxu0 0.0
          %1099 = vmatpush2.msra.mxu0 0.0
          %1100 = vmatprep.subr.mxu0 0.0
          %1101 = vmatpush2.msra.mxu0 0.0
          %1102 = vmatprep.subr.mxu0 0.0
          %1103 = vmatpush2.msra.mxu0 0.0
          %1104 = vmatprep.subr.mxu0 0.0
          %1105 = vmatpush2.msra.mxu0 0.0
          %1106 = vmatprep.subr.mxu0 0.0
          %1107 = vmatpush2.msra.mxu0 0.0
          %1108 = vmatprep.subr.mxu0 0.0
          %1109 = vmatpush2.msra.mxu0 0.0
          %1110 = vmatprep.subr.mxu0 0.0
          %1111 = vmatpush2.msra.mxu0 0.0
          %1112 = vmatprep.subr.mxu0 0.0
          %1113 = vmatpush2.msra.mxu0 0.0
          %1114 = vmatprep.mubr.f32.mxu0 0.0
          %1115 = vmatmul.mubr.f32.gmra.mxu0 %v1048
          %v1116 = vpop.f32.mrf.mxu0
          %v1117 = vadd.f32 0.0, %v1116
          %v1118 = vpop.f32.mrf.mxu0
          %1119 = vdwg.mxu0
          %v1120 = vadd.f32 %v1043, %v1117
        $region87: #{tpu_custom_call.1} parent=47 // loop_footer
          %s933 = sadd.s32 %s931, 1
        $region88: #{tpu_custom_call.1} parent=47 // loop_footer_branch
          %930 = sbr.rel target = $region84
        $region89: #{tpu_custom_call.1} parent=47 // loop_exit
          _
        %v1121 = vrcp.pop %v937
        %v1122 = vmul.f32 %v938, %v1121
        %1124 = vrot.lane.b32.xlu0 %v1122, 16
        %v1125 = vpop.permute.xlu0 %1124
        %vm1127 = vcmask 195712
        %1128 = vst.msk [vmem:[#allocation3] sm:$0xff] %vm1127, %v1125
        // While loop
        $region90: #{tpu_custom_call.1} parent=47 // loop_pre_header
          _
        $region91: #{tpu_custom_call.1} parent=47 // loop_header
          %s1130 = sphi 0, %s1132
          %p1131 = scmp.ge.s32.totalorder %s1130, %s538
          %v1135 = vphi -1e+30, %v1230
          %v1136 = vphi 0.0, %v1241
          %v1137 = vphi 0.0, %v1319
        $region92: #{tpu_custom_call.1} parent=47 // loop_header_branch
          %1134 = sbr.rel (%p1131) target = $region96
        $region93: #{tpu_custom_call.1} parent=47 // loop_body
          %s1138 = smul.u32 %s1130, 8
          %s1139 = scalar_lea.vmem [#allocation2], %s1138
          %v1140 = vld [vmem:[%s1139] sm:$0xff]
          %1142 = vrot.lane.b32.xlu0 %v532, 104
          %v1143 = vpop.permute.xlu0 %1142
          %1145 = vrot.lane.b32.xlu0 %v1140, 104
          %v1146 = vpop.permute.xlu0 %1145
          %v1147 = vsel %vm729, %v1143, 0
          %v1149 = vsel %vm729, %v1146, 0
          %1151 = vmatprep.subr.mxu0 0.0
          %1152 = vmatpush1.xpose.msra.mxu0 0.0
          %1153 = vmatprep.subr.mxu0 0.0
          %1154 = vmatpush1.xpose.msra.mxu0 0.0
          %1155 = vmatprep.subr.mxu0 0.0
          %1156 = vmatpush1.xpose.msra.mxu0 0.0
          %1157 = vmatprep.subr.mxu0 0.0
          %1158 = vmatpush1.xpose.msra.mxu0 0.0
          %1159 = vmatprep.subr.mxu0 0.0
          %1160 = vmatpush1.xpose.msra.mxu0 0.0
          %1161 = vmatprep.subr.mxu0 0.0
          %1162 = vmatpush1.xpose.msra.mxu0 0.0
          %1163 = vmatprep.subr.mxu0 0.0
          %1164 = vmatpush1.xpose.msra.mxu0 0.0
          %1165 = vmatprep.subr.mxu0 0.0
          %1166 = vmatpush1.xpose.msra.mxu0 0.0
          %1167 = vmatprep.subr.mxu0 0.0
          %1168 = vmatpush1.xpose.msra.mxu0 0.0
          %1169 = vmatprep.subr.mxu0 0.0
          %1170 = vmatpush1.xpose.msra.mxu0 0.0
          %1171 = vmatprep.subr.mxu0 0.0
          %1172 = vmatpush1.xpose.msra.mxu0 0.0
          %1173 = vmatprep.subr.mxu0 0.0
          %1174 = vmatpush1.xpose.msra.mxu0 0.0
          %1175 = vmatprep.subr.mxu0 0.0
          %1176 = vmatpush1.xpose.msra.mxu0 0.0
          %1177 = vmatprep.subr.mxu0 0.0
          %1178 = vmatpush1.xpose.msra.mxu0 0.0
          %1179 = vmatprep.subr.mxu0 0.0
          %1180 = vmatpush1.xpose.msra.mxu0 0.0
          %1181 = vmatprep.subr.mxu0 0.0
          %1182 = vmatpush1.xpose.msra.mxu0 %v1149
          %1183 = vmatprep.subr.mxu0 0.0
          %1184 = vmatpush2.xpose.msra.mxu0 0.0
          %1185 = vmatprep.subr.mxu0 0.0
          %1186 = vmatpush2.xpose.msra.mxu0 0.0
          %1187 = vmatprep.subr.mxu0 0.0
          %1188 = vmatpush2.xpose.msra.mxu0 0.0
          %1189 = vmatprep.subr.mxu0 0.0
          %1190 = vmatpush2.xpose.msra.mxu0 0.0
          %1191 = vmatprep.subr.mxu0 0.0
          %1192 = vmatpush2.xpose.msra.mxu0 0.0
          %1193 = vmatprep.subr.mxu0 0.0
          %1194 = vmatpush2.xpose.msra.mxu0 0.0
          %1195 = vmatprep.subr.mxu0 0.0
          %1196 = vmatpush2.xpose.msra.mxu0 0.0
          %1197 = vmatprep.subr.mxu0 0.0
          %1198 = vmatpush2.xpose.msra.mxu0 0.0
          %1199 = vmatprep.subr.mxu0 0.0
          %1200 = vmatpush2.xpose.msra.mxu0 0.0
          %1201 = vmatprep.subr.mxu0 0.0
          %1202 = vmatpush2.xpose.msra.mxu0 0.0
          %1203 = vmatprep.subr.mxu0 0.0
          %1204 = vmatpush2.xpose.msra.mxu0 0.0
          %1205 = vmatprep.subr.mxu0 0.0
          %1206 = vmatpush2.xpose.msra.mxu0 0.0
          %1207 = vmatprep.subr.mxu0 0.0
          %1208 = vmatpush2.xpose.msra.mxu0 0.0
          %1209 = vmatprep.subr.mxu0 0.0
          %1210 = vmatpush2.xpose.msra.mxu0 0.0
          %1211 = vmatprep.subr.mxu0 0.0
          %1212 = vmatpush2.xpose.msra.mxu0 0.0
          %1213 = vmatprep.subr.mxu0 0.0
          %1214 = vmatpush2.xpose.msra.mxu0 0.0
          %1215 = vmatprep.mubr.f32.mxu0 0.0
          %1216 = vmatmul.mubr.f32.gmra.mxu0 %v1147
          %v1217 = vpop.f32.mrf.mxu0
          %v1218 = vadd.f32 0.0, %v1217
          %v1219 = vpop.f32.mrf.mxu0
          %1220 = vdwg.mxu0
          %p1221 = scmp.lt.s32.totalorder %s1130, %s31
          %s1222 = scalar_select %p1221, 1, 0
          %v1223 = vstv %s1222
          %vm1224 = vcmp.eq.s32.totalorder %v1223, 1
          %vm1225 = vmor %vm1224, %vm537
          %v1226 = vsel %vm1225, %v1218, -1e+30
          %v1227 = vsel %vm729, %v1226, -inf
          %1228 = vmax.xlane.f32.xlu0 %v1227
          %v1229 = vpop.xlane.xlu0 %1228
          %v1230 = vmax.f32 %v1135, %v1229
          %v1231 = vsub.f32 %v1135, %v1230
          %v1232 = vmul.f32 %v1231, 1.442695
          %v1233 = vpow.pop %v1232
          %v1234 = vsub.f32 %v1226, %v1230
          %v1235 = vmul.f32 %v1234, 1.442695
          %v1236 = vpow.pop %v1235
          %v1237 = vmul.f32 %v1233, %v1136
          %v1238 = vsel %vm729, %v1236, 0.0
          %1239 = vadd.xlane.f32.xlu0 %v1238
          %v1240 = vpop.xlane.xlu0 %1239
          %v1241 = vadd.f32 %v1237, %v1240
          %v1242 = vmul.f32 %v1233, %v1137
          %1243 = vrot.lane.b32.xlu0 %v1140, 72
          %v1244 = vpop.permute.xlu0 %1243
          %v1247 = vsel %vm729, %v1236, 0
          %1249 = vmatprep.subr.mxu0 0.0
          %1250 = vmatpush1.msra.mxu0 0.0
          %1251 = vmatprep.subr.mxu0 0.0
          %1252 = vmatpush1.msra.mxu0 0.0
          %1253 = vmatprep.subr.mxu0 0.0
          %1254 = vmatpush1.msra.mxu0 0.0
          %1255 = vmatprep.subr.mxu0 0.0
          %1256 = vmatpush1.msra.mxu0 0.0
          %1257 = vmatprep.subr.mxu0 0.0
          %1258 = vmatpush1.msra.mxu0 0.0
          %1259 = vmatprep.subr.mxu0 0.0
          %1260 = vmatpush1.msra.mxu0 0.0
          %1261 = vmatprep.subr.mxu0 0.0
          %1262 = vmatpush1.msra.mxu0 0.0
          %1263 = vmatprep.subr.mxu0 0.0
          %1264 = vmatpush1.msra.mxu0 0.0
          %1265 = vmatprep.subr.mxu0 0.0
          %1266 = vmatpush1.msra.mxu0 0.0
          %1267 = vmatprep.subr.mxu0 0.0
          %1268 = vmatpush1.msra.mxu0 0.0
          %1269 = vmatprep.subr.mxu0 0.0
          %1270 = vmatpush1.msra.mxu0 0.0
          %1271 = vmatprep.subr.mxu0 0.0
          %1272 = vmatpush1.msra.mxu0 0.0
          %1273 = vmatprep.subr.mxu0 0.0
          %1274 = vmatpush1.msra.mxu0 0.0
          %1275 = vmatprep.subr.mxu0 0.0
          %1276 = vmatpush1.msra.mxu0 0.0
          %1277 = vmatprep.subr.mxu0 0.0
          %1278 = vmatpush1.msra.mxu0 0.0
          %1279 = vmatprep.subr.mxu0 0.0
          %1280 = vmatpush1.msra.mxu0 %v1244
          %1281 = vmatprep.subr.mxu0 0.0
          %1282 = vmatpush2.msra.mxu0 0.0
          %1283 = vmatprep.subr.mxu0 0.0
          %1284 = vmatpush2.msra.mxu0 0.0
          %1285 = vmatprep.subr.mxu0 0.0
          %1286 = vmatpush2.msra.mxu0 0.0
          %1287 = vmatprep.subr.mxu0 0.0
          %1288 = vmatpush2.msra.mxu0 0.0
          %1289 = vmatprep.subr.mxu0 0.0
          %1290 = vmatpush2.msra.mxu0 0.0
          %1291 = vmatprep.subr.mxu0 0.0
          %1292 = vmatpush2.msra.mxu0 0.0
          %1293 = vmatprep.subr.mxu0 0.0
          %1294 = vmatpush2.msra.mxu0 0.0
          %1295 = vmatprep.subr.mxu0 0.0
          %1296 = vmatpush2.msra.mxu0 0.0
          %1297 = vmatprep.subr.mxu0 0.0
          %1298 = vmatpush2.msra.mxu0 0.0
          %1299 = vmatprep.subr.mxu0 0.0
          %1300 = vmatpush2.msra.mxu0 0.0
          %1301 = vmatprep.subr.mxu0 0.0
          %1302 = vmatpush2.msra.mxu0 0.0
          %1303 = vmatprep.subr.mxu0 0.0
          %1304 = vmatpush2.msra.mxu0 0.0
          %1305 = vmatprep.subr.mxu0 0.0
          %1306 = vmatpush2.msra.mxu0 0.0
          %1307 = vmatprep.subr.mxu0 0.0
          %1308 = vmatpush2.msra.mxu0 0.0
          %1309 = vmatprep.subr.mxu0 0.0
          %1310 = vmatpush2.msra.mxu0 0.0
          %1311 = vmatprep.subr.mxu0 0.0
          %1312 = vmatpush2.msra.mxu0 0.0
          %1313 = vmatprep.mubr.f32.mxu0 0.0
          %1314 = vmatmul.mubr.f32.gmra.mxu0 %v1247
          %v1315 = vpop.f32.mrf.mxu0
          %v1316 = vadd.f32 0.0, %v1315
          %v1317 = vpop.f32.mrf.mxu0
          %1318 = vdwg.mxu0
          %v1319 = vadd.f32 %v1242, %v1316
        $region94: #{tpu_custom_call.1} parent=47 // loop_footer
          %s1132 = sadd.s32 %s1130, 1
        $region95: #{tpu_custom_call.1} parent=47 // loop_footer_branch
          %1129 = sbr.rel target = $region91
        $region96: #{tpu_custom_call.1} parent=47 // loop_exit
          _
        %v1320 = vrcp.pop %v1136
        %v1321 = vmul.f32 %v1137, %v1320
        %1323 = vrot.lane.b32.xlu0 %v1321, 24
        %v1324 = vpop.permute.xlu0 %1323
        %vm1326 = vcmask 261312
        %1327 = vst.msk [vmem:[#allocation3] sm:$0xff] %vm1326, %v1324
        %v1328 = vld [vmem:[#allocation3] sm:$0xff]
        %v1329 = vld [vmem:[#allocation10] sm:$0xff]
        %v1330 = vld [vmem:[#allocation10 + $0x8] sm:$0xff]
        %v1331 = vld [vmem:[#allocation10 + $0x10] sm:$0xff]
        %v1332 = vld [vmem:[#allocation10 + $0x18] sm:$0xff]
        %v1333 = vld [vmem:[%s6] sm:$0x1]
        %v1335 = vlaneseq
        %v1336 = vshrl.u32 %v1335, 7
        %v1337 = vsub.s32 0, %v1336
        %v1338 = vrot.slane %v1333, %v1337
        %v1341 = vsel %vm458, %v1328, 0
        %1343 = vmatprep.subr.mxu0 0.0
        %1344 = vmatpush1.msra.mxu0 0.0
        %1345 = vmatprep.subr.mxu0 0.0
        %1346 = vmatpush1.msra.mxu0 0.0
        %1347 = vmatprep.subr.mxu0 0.0
        %1348 = vmatpush1.msra.mxu0 0.0
        %1349 = vmatprep.subr.mxu0 0.0
        %1350 = vmatpush1.msra.mxu0 0.0
        %1351 = vmatprep.subr.mxu0 0.0
        %1352 = vmatpush1.msra.mxu0 0.0
        %1353 = vmatprep.subr.mxu0 0.0
        %1354 = vmatpush1.msra.mxu0 0.0
        %1355 = vmatprep.subr.mxu0 0.0
        %1356 = vmatpush1.msra.mxu0 0.0
        %1357 = vmatprep.subr.mxu0 0.0
        %1358 = vmatpush1.msra.mxu0 0.0
        %1359 = vmatprep.subr.mxu0 0.0
        %1360 = vmatpush1.msra.mxu0 0.0
        %1361 = vmatprep.subr.mxu0 0.0
        %1362 = vmatpush1.msra.mxu0 0.0
        %1363 = vmatprep.subr.mxu0 0.0
        %1364 = vmatpush1.msra.mxu0 0.0
        %1365 = vmatprep.subr.mxu0 0.0
        %1366 = vmatpush1.msra.mxu0 0.0
        %1367 = vmatprep.subr.mxu0 0.0
        %1368 = vmatpush1.msra.mxu0 %v1332
        %1369 = vmatprep.subr.mxu0 0.0
        %1370 = vmatpush1.msra.mxu0 %v1331
        %1371 = vmatprep.subr.mxu0 0.0
        %1372 = vmatpush1.msra.mxu0 %v1330
        %1373 = vmatprep.subr.mxu0 0.0
        %1374 = vmatpush1.msra.mxu0 %v1329
        %1375 = vmatprep.subr.mxu0 0.0
        %1376 = vmatpush2.msra.mxu0 0.0
        %1377 = vmatprep.subr.mxu0 0.0
        %1378 = vmatpush2.msra.mxu0 0.0
        %1379 = vmatprep.subr.mxu0 0.0
        %1380 = vmatpush2.msra.mxu0 0.0
        %1381 = vmatprep.subr.mxu0 0.0
        %1382 = vmatpush2.msra.mxu0 0.0
        %1383 = vmatprep.subr.mxu0 0.0
        %1384 = vmatpush2.msra.mxu0 0.0
        %1385 = vmatprep.subr.mxu0 0.0
        %1386 = vmatpush2.msra.mxu0 0.0
        %1387 = vmatprep.subr.mxu0 0.0
        %1388 = vmatpush2.msra.mxu0 0.0
        %1389 = vmatprep.subr.mxu0 0.0
        %1390 = vmatpush2.msra.mxu0 0.0
        %1391 = vmatprep.subr.mxu0 0.0
        %1392 = vmatpush2.msra.mxu0 0.0
        %1393 = vmatprep.subr.mxu0 0.0
        %1394 = vmatpush2.msra.mxu0 0.0
        %1395 = vmatprep.subr.mxu0 0.0
        %1396 = vmatpush2.msra.mxu0 0.0
        %1397 = vmatprep.subr.mxu0 0.0
        %1398 = vmatpush2.msra.mxu0 0.0
        %1399 = vmatprep.subr.mxu0 0.0
        %1400 = vmatpush2.msra.mxu0 0.0
        %1401 = vmatprep.subr.mxu0 0.0
        %1402 = vmatpush2.msra.mxu0 0.0
        %1403 = vmatprep.subr.mxu0 0.0
        %1404 = vmatpush2.msra.mxu0 0.0
        %1405 = vmatprep.subr.mxu0 0.0
        %1406 = vmatpush2.msra.mxu0 0.0
        %1407 = vmatprep.mubr.f32.mxu0 0.0
        %1408 = vmatmul.mubr.f32.gmra.mxu0 %v1341
        %v1409 = vpop.f32.mrf.mxu0
        %v1410 = vadd.f32 %v1338, %v1409
        %v1411 = vpop.f32.mrf.mxu0
        %1412 = vdwg.mxu0
        %1413 = vst.msk [vmem:[%s351] sm:$0xff] %vm458, %v1410
        %s1414 = sand.u32 %s200, 1
        %s1415 = scalar_lea.sflag [#allocation6], %s1414
        %s1416 = sand.u32 %s200, 1
        %s1417 = smul.addr %s1416, 8
        %s1418 = scalar_lea.vmem [#allocation12], %s1417
        // Predicated region
        $region97: #{tpu_custom_call.1} parent=47 // pred_check
          %p1419 = pneg %p210
        $region98: #{tpu_custom_call.1} parent=47 // pred_check_branch
          %1421 = sbr.rel (%p1419) target = $region100
        $region99: #{tpu_custom_call.1} parent=47 // pred_region
          %s1423 = ssub.s32 128, 128
          %1424 = vsyncadd %s1415, %s1423
          %s1425 = sadd.s32 %s31, %s30
          %s1426 = smul.addr %s1425, 128
          %s1427 = scalar_lea.hbm %s7, %s1426
          %s1429 = sshll.u32 %s1418, 4
          %s1430 = int_to_ptr.vmem [resolvable:$true] %s1429
          %1432 = dma.vmem_to_hbm [thread:$0]  %s1430, 128, %s1427, %s1415
        $region100: #{tpu_custom_call.1} parent=47 // pred_fallthru
          _
      $region48: #{tpu_custom_call.1} parent=5 // pred_fallthru
        _
      %p1433 = scmp.le.s32.totalorder 2, %s21
      // Predicated region
      $region101: #{tpu_custom_call.1} parent=5 // pred_check
        %p1434 = pneg %p1433
      $region102: #{tpu_custom_call.1} parent=5 // pred_check_branch
        %1436 = sbr.rel (%p1434) target = $region104
      $region103: #{tpu_custom_call.1} parent=5 // pred_region
        %s1437 = ssub.s32 %s21, 2
        // Predicated region
        $region105: #{tpu_custom_call.1} parent=103 // pred_check
          %p1438 = pneg %p216
        $region106: #{tpu_custom_call.1} parent=103 // pred_check_branch
          %1440 = sbr.rel (%p1438) target = $region108
        $region107: #{tpu_custom_call.1} parent=103 // pred_region
          %s1441 = sand.u32 %s201, 1
          %s1442 = scalar_lea.sflag [#allocation6], %s1441
          %s1443 = sand.u32 %s201, 1
          %s1444 = smul.addr %s1443, 8
          %s1445 = scalar_lea.vmem [#allocation12], %s1444
          %1446 = dma.done %s1442, 128
        $region108: #{tpu_custom_call.1} parent=103 // pred_fallthru
          _
      $region104: #{tpu_custom_call.1} parent=5 // pred_fallthru
        _
    $region6: #{tpu_custom_call.1} parent=1 // loop_footer
      %s25 = sadd.s32 1, %s21
    $region7: #{tpu_custom_call.1} parent=1 // loop_footer_branch
      %20 = sbr.rel target = $region3
    $region8: #{tpu_custom_call.1} parent=1 // loop_exit
      _
    %1447 = vsyncpa [#allocation5], 1
    %s1448 = scalar_lea.sflag [#allocation5], 1
    %1449 = vsyncpa %s1448, 1
    %1450 = vsyncpa [#allocation8], 1
    %1451 = vsyncpa [#allocation11], 1
    %1452 = vsyncpa [#allocation6], 1
    %s1453 = scalar_lea.sflag [#allocation6], 1
    %1454 = vsyncpa %s1453, 1

</llo_original>
